<compile_context>
chip_gen: v7x
topology: tpu7x:2x2x1
jax: 0.10.0
libtpu: 0.0.40
codegen_flags: <defaults>
</compile_context>

<pallas_src>
import jax
import jax.numpy as jnp
from jax import lax
from jax.experimental import pallas as pl
from jax.experimental.pallas import tpu as pltpu

BN_EPS = 1e-5


# --------------------------------------------------------------------------- #
# Pallas kernel: full decoder forward for one batch tile.
# --------------------------------------------------------------------------- #
def _decoder_kernel(x_ref, w0_ref, s0_ref, t0_ref,
                    w1_ref, s1_ref, t1_ref,
                    w2_ref, b2_ref, o_ref):
    """Shapes (per grid step):
      x_ref : (Bt, L+4, Cin)   bf16  channels-last, zero-padded for k=5 'same'
      w0_ref: (5, Cin, 2H)     bf16
      w1_ref: (3, 2H, H)       bf16
      w2_ref: (H, Cout)        bf16
      s*/t* : (1, C)           f32   folded BN scale / (BN shift + conv bias)
      b2_ref: (1, Cout)        f32
      o_ref : (Bt, Cout, 4, L) f32   axis 2 = phase p of output index 4*i + p
    """
    f32 = jnp.float32
    bf16 = jnp.bfloat16

    bt = x_ref.shape[0]
    L = x_ref.shape[1] - 4
    c2 = w0_ref.shape[2]

    s0 = s0_ref[...]
    t0 = t0_ref[...]
    s1 = s1_ref[...]
    t1 = t1_ref[...]
    w2 = w2_ref[...]
    b2 = b2_ref[...]
    zpad = jnp.zeros((1, c2), bf16)

    for b in range(bt):
        xb = x_ref[b]                                            # (L+4, Cin)

        # ---- cnn_0: Conv1d(k=5,'same') + BN + ReLU (bias folded into t0) ----
        acc0 = jnp.dot(xb[0:L, :], w0_ref[0], preferred_element_type=f32)
        for k in range(1, 5):
            acc0 = acc0 + jnp.dot(xb[k:k + L, :], w0_ref[k],
                                  preferred_element_type=f32)
        y0 = jnp.maximum(acc0 * s0 + t0, 0.0)                    # (L, 2H) f32

        # ---- interpolate x2 (linear, align_corners=False): 2-tap stencil ----
        # up[2i]   = 0.25*y0[i-1] + 0.75*y0[i]   (clamped at i=0)
        # up[2i+1] = 0.75*y0[i]   + 0.25*y0[i+1] (clamped at i=L-1)
        prev0 = jnp.concatenate([y0[:1], y0[:-1]], axis=0)
        next0 = jnp.concatenate([y0[1:], y0[-1:]], axis=0)
        even0 = (0.75 * y0 + 0.25 * prev0).astype(bf16)          # up[2i]
        odd0 = (0.75 * y0 + 0.25 * next0).astype(bf16)           # up[2i+1]

        # ---- cnn_1: Conv1d(k=3,'same') applied to the phase-separated seq ----
        # z[2i]   = w1[0]*up[2i-1] + w1[1]*up[2i]   + w1[2]*up[2i+1]
        # z[2i+1] = w1[0]*up[2i]   + w1[1]*up[2i+1] + w1[2]*up[2i+2]
        odd0_prev = jnp.concatenate([zpad, odd0[:-1]], axis=0)    # zero-padded
        even0_next = jnp.concatenate([even0[1:], zpad], axis=0)   # zero-padded
        acc_e = (jnp.dot(odd0_prev, w1_ref[0], preferred_element_type=f32)
                 + jnp.dot(even0, w1_ref[1], preferred_element_type=f32)
                 + jnp.dot(odd0, w1_ref[2], preferred_element_type=f32))
        acc_o = (jnp.dot(even0, w1_ref[0], preferred_element_type=f32)
                 + jnp.dot(odd0, w1_ref[1], preferred_element_type=f32)
                 + jnp.dot(even0_next, w1_ref[2], preferred_element_type=f32))
        y1e = jnp.maximum(acc_e * s1 + t1, 0.0).astype(bf16)      # (L, H)
        y1o = jnp.maximum(acc_o * s1 + t1, 0.0).astype(bf16)

        # ---- last: Conv1d(k=1).  A pointwise conv commutes with the linear
        # interpolation (interp rows sum to 1), so apply it before upsampling
        # while the channel width is still small. --------------------------- #
        qe = jnp.dot(y1e, w2, preferred_element_type=f32) + b2    # (L, Cout)
        qo = jnp.dot(y1o, w2, preferred_element_type=f32) + b2

        # channels-first: the remaining stencil + stores are lane-dense over L
        qet = qe.T                                                # (Cout, L)
        qot = qo.T

        # ---- interpolate x2 again, phase-separated over the final axis ------
        # out[4i+0] = 0.25*q[2i-1] + 0.75*q[2i]     (clamped at i=0)
        # out[4i+1] = 0.75*q[2i]   + 0.25*q[2i+1]
        # out[4i+2] = 0.25*q[2i]   + 0.75*q[2i+1]
        # out[4i+3] = 0.75*q[2i+1] + 0.25*q[2i+2]   (clamped at i=L-1)
        prev_q = jnp.concatenate([qet[:, :1], qot[:, :-1]], axis=1)
        next_q = jnp.concatenate([qet[:, 1:], qot[:, -1:]], axis=1)
        o_ref[b, :, 0, :] = (0.75 * qet + 0.25 * prev_q).astype(o_ref.dtype)
        o_ref[b, :, 1, :] = (0.75 * qet + 0.25 * qot).astype(o_ref.dtype)
        o_ref[b, :, 2, :] = (0.25 * qet + 0.75 * qot).astype(o_ref.dtype)
        o_ref[b, :, 3, :] = (0.75 * qot + 0.25 * next_q).astype(o_ref.dtype)


# --------------------------------------------------------------------------- #
# Wrapper: layout prep, BN/bias folding, grid setup, phase interleave.
# --------------------------------------------------------------------------- #
def _pick_batch_tile(batch: int) -> int:
    """Largest divisor of `batch` (<= 8) that still leaves >= 2 grid steps."""
    bt = 1
    for cand in range(1, min(batch, 8) + 1):
        if batch % cand == 0 and batch // cand >= 2:
            bt = cand
    return bt


def cnn_ts_dec_forward(x_ncl, params, batch_tile=None):
    """x_ncl: (B, inp_feats, L) f32 -> (B, out_feats, 4L) f32."""
    B, Cin, L = x_ncl.shape

    # channels-last, zero-pad length for k=5 'same', bf16 matmul operand
    x = jnp.transpose(x_ncl, (0, 2, 1)).astype(jnp.bfloat16)     # (B, L, Cin)
    xp = jnp.pad(x, ((0, 0), (2, 2), (0, 0)))                    # (B, L+4, Cin)

    # torch (Cout, Cin, K) -> (K, Cin, Cout): each tap is a matmul RHS
    w0 = jnp.transpose(params["w0"], (2, 1, 0)).astype(jnp.bfloat16)  # (5,Cin,2H)
    w1 = jnp.transpose(params["w1"], (2, 1, 0)).astype(jnp.bfloat16)  # (3,2H,H)
    w2 = jnp.transpose(params["w2"][:, :, 0]).astype(jnp.bfloat16)    # (H,Cout)
    Cout = w2.shape[1]

    # eval-mode BN + conv bias folded into one per-channel affine
    s0 = params["gamma0"] / jnp.sqrt(params["var0"] + BN_EPS)
    t0 = params["beta0"] + (params["b0"] - params["mean0"]) * s0
    s1 = params["gamma1"] / jnp.sqrt(params["var1"] + BN_EPS)
    t1 = params["beta1"] + (params["b1"] - params["mean1"]) * s1
    s0, t0 = s0[None].astype(jnp.float32), t0[None].astype(jnp.float32)
    s1, t1 = s1[None].astype(jnp.float32), t1[None].astype(jnp.float32)
    b2 = params["b2"][None].astype(jnp.float32)

    Bt = _pick_batch_tile(B) if batch_tile is None else batch_tile
    assert B % Bt == 0, (B, Bt)

    def full_spec(a):
        return pl.BlockSpec(a.shape, lambda g, _nd=a.ndim: (0,) * _nd)

    grid_spec = pltpu.PrefetchScalarGridSpec(
        num_scalar_prefetch=0,
        grid=(B // Bt,),
        in_specs=[
            pl.BlockSpec((Bt, L + 4, Cin), lambda g: (g, 0, 0)),
            full_spec(w0), full_spec(s0), full_spec(t0),
            full_spec(w1), full_spec(s1), full_spec(t1),
            full_spec(w2), full_spec(b2),
        ],
        out_specs=pl.BlockSpec((Bt, Cout, 4, L), lambda g: (g, 0, 0, 0)),
    )

    out4 = pl.pallas_call(
        _decoder_kernel,
        out_shape=jax.ShapeDtypeStruct((B, Cout, 4, L), jnp.float32),
        grid_spec=grid_spec,
        compiler_params=pltpu.CompilerParams(dimension_semantics=("parallel",)),
    )(xp, w0, s0, t0, w1, s1, t1, w2, b2)

    # axis 2 holds the 4 phases of the final length axis:
    # out[b, c, 4i + p] = out4[b, c, p, i]
    return jnp.transpose(out4, (0, 1, 3, 2)).reshape(B, Cout, 4 * L)


# --------------------------------------------------------------------------- #
# Deterministic parameter init (matches the __init__ shapes of CNN_TS_dec).
# --------------------------------------------------------------------------- #
def init_params(key, inp_feats, hid_feats, out_feats):
    ks = jax.random.split(key, 16)
    h2 = hid_feats * 2

    def u(k, shape, fan_in):
        bound = 1.0 / jnp.sqrt(jnp.float32(fan_in))
        return jax.random.uniform(k, shape, jnp.float32, -bound, bound)

    return dict(
        w0=u(ks[0], (h2, inp_feats, 5), inp_feats * 5),
        b0=u(ks[1], (h2,), inp_feats * 5),
        gamma0=jax.random.uniform(ks[2], (h2,), jnp.float32, 0.5, 1.5),
        beta0=0.1 * jax.random.normal(ks[3], (h2,), jnp.float32),
        mean0=0.1 * jax.random.normal(ks[4], (h2,), jnp.float32),
        var0=jax.random.uniform(ks[5], (h2,), jnp.float32, 0.5, 1.5),
        w1=u(ks[6], (hid_feats, h2, 3), h2 * 3),
        b1=u(ks[7], (hid_feats,), h2 * 3),
        gamma1=jax.random.uniform(ks[8], (hid_feats,), jnp.float32, 0.5, 1.5),
        beta1=0.1 * jax.random.normal(ks[9], (hid_feats,), jnp.float32),
        mean1=0.1 * jax.random.normal(ks[10], (hid_feats,), jnp.float32),
        var1=jax.random.uniform(ks[11], (hid_feats,), jnp.float32, 0.5, 1.5),
        w2=u(ks[12], (out_feats, hid_feats, 1), hid_feats),
        b2=u(ks[13], (out_feats,), hid_feats),
    )


# --------------------------------------------------------------------------- #
# Pure-JAX f32 reference (lax.conv + gather-based interpolation).
# --------------------------------------------------------------------------- #
def reference_forward(x, p):
    def conv(x, w, b, pad):
        y = lax.conv_general_dilated(x, w, window_strides=(1,),
                                     padding=[(pad, pad)],
                                     dimension_numbers=("NCH", "OIH", "NCH"))
        return y + b[None, :, None]

    def bn_relu(x, g, be, m, v):
        s = g / jnp.sqrt(v + BN_EPS)
        return jnp.maximum(x * s[None, :, None] + (be - m * s)[None, :, None], 0.0)

    def interp2(x):
        L = x.shape[-1]
        j = jnp.arange(2 * L, dtype=jnp.float32)
        src = jnp.maximum((j + 0.5) * 0.5 - 0.5, 0.0)
        i0 = jnp.floor(src).astype(jnp.int32)
        lam = src - i0.astype(jnp.float32)
        i1 = jnp.minimum(i0 + 1, L - 1)
        return x[..., i0] * (1.0 - lam) + x[..., i1] * lam

    y = bn_relu(conv(x, p["w0"], p["b0"], 2), p["gamma0"], p["beta0"], p["mean0"], p["var0"])
    y = interp2(y)
    y = bn_relu(conv(y, p["w1"], p["b1"], 1), p["gamma1"], p["beta1"], p["mean1"], p["var1"])
    y = interp2(y)
    return conv(y, p["w2"], p["b2"], 0)


if __name__ == "__main__":
    key = jax.random.PRNGKey(0)
    k_x, k_p = jax.random.split(key)

    B, inp_feats, hid_feats, out_feats, L = 2, 4, 16, 3, 16
    x = jax.random.normal(k_x, (B, inp_feats, L), jnp.float32)   # NCL, like PyTorch
    params = init_params(k_p, inp_feats, hid_feats, out_feats)

    fwd = jax.jit(cnn_ts_dec_forward)
    out = jax.block_until_ready(fwd(x, params))
    ref = jax.block_until_ready(reference_forward(x, params))

    assert out.shape == (B, out_feats, 4 * L), out.shape
    max_err = float(jnp.max(jnp.abs(out - ref)))
    # bf16 matmul operands (f32 accumulation) vs. a pure-f32 reference.
    assert jnp.allclose(out, ref, rtol=5e-2, atol=5e-2), max_err

    print("KERNEL_OK")
</pallas_src>

<mosaic_0001>
module attributes {stable_mosaic.version = 11 : i64} {
  func.func @_decoder_kernel(%arg0: i32, %arg1: memref<1x20x4xbf16, #tpu.memory_space<vmem>>, %arg2: memref<5x4x32xbf16, #tpu.memory_space<vmem>>, %arg3: memref<1x32xf32, #tpu.memory_space<vmem>>, %arg4: memref<1x32xf32, #tpu.memory_space<vmem>>, %arg5: memref<3x32x16xbf16, #tpu.memory_space<vmem>>, %arg6: memref<1x16xf32, #tpu.memory_space<vmem>>, %arg7: memref<1x16xf32, #tpu.memory_space<vmem>>, %arg8: memref<16x3xbf16, #tpu.memory_space<vmem>>, %arg9: memref<1x3xf32, #tpu.memory_space<vmem>>, %arg10: memref<1x3x4x16xf32, #tpu.memory_space<vmem>>) attributes {dimension_semantics = [#tpu.dimension_semantics<parallel>], iteration_bounds = array<i64: 2>, scalar_prefetch = 0 : i64, scratch_operands = 0 : i64, tpu.core_type = #tpu.core_type<tc>, window_params = [{transform_indices = @transform_0, window_bounds = array<i64: 1, 20, 4>}, {pipeline_mode = #tpu.pipeline_mode<synchronous>, transform_indices = @transform_1, window_bounds = array<i64: 5, 4, 32>}, {pipeline_mode = #tpu.pipeline_mode<synchronous>, transform_indices = @transform_2, window_bounds = array<i64: 1, 32>}, {pipeline_mode = #tpu.pipeline_mode<synchronous>, transform_indices = @transform_3, window_bounds = array<i64: 1, 32>}, {pipeline_mode = #tpu.pipeline_mode<synchronous>, transform_indices = @transform_4, window_bounds = array<i64: 3, 32, 16>}, {pipeline_mode = #tpu.pipeline_mode<synchronous>, transform_indices = @transform_5, window_bounds = array<i64: 1, 16>}, {pipeline_mode = #tpu.pipeline_mode<synchronous>, transform_indices = @transform_6, window_bounds = array<i64: 1, 16>}, {pipeline_mode = #tpu.pipeline_mode<synchronous>, transform_indices = @transform_7, window_bounds = array<i64: 16, 3>}, {pipeline_mode = #tpu.pipeline_mode<synchronous>, transform_indices = @transform_8, window_bounds = array<i64: 1, 3>}, {transform_indices = @transform_9, window_bounds = array<i64: 1, 3, 4, 16>}]} {
    %c0 = arith.constant 0 : index
    %c0_0 = arith.constant 0 : index
    %0 = vector.load %arg3[%c0, %c0_0] : memref<1x32xf32, #tpu.memory_space<vmem>>, vector<1x32xf32>
    %c0_1 = arith.constant 0 : index
    %c0_2 = arith.constant 0 : index
    %1 = vector.load %arg4[%c0_1, %c0_2] : memref<1x32xf32, #tpu.memory_space<vmem>>, vector<1x32xf32>
    %c0_3 = arith.constant 0 : index
    %c0_4 = arith.constant 0 : index
    %2 = vector.load %arg6[%c0_3, %c0_4] : memref<1x16xf32, #tpu.memory_space<vmem>>, vector<1x16xf32>
    %c0_5 = arith.constant 0 : index
    %c0_6 = arith.constant 0 : index
    %3 = vector.load %arg7[%c0_5, %c0_6] : memref<1x16xf32, #tpu.memory_space<vmem>>, vector<1x16xf32>
    %c0_7 = arith.constant 0 : index
    %c0_8 = arith.constant 0 : index
    %4 = vector.load %arg8[%c0_7, %c0_8] : memref<16x3xbf16, #tpu.memory_space<vmem>>, vector<16x3xbf16>
    %c0_9 = arith.constant 0 : index
    %c0_10 = arith.constant 0 : index
    %5 = vector.load %arg9[%c0_9, %c0_10] : memref<1x3xf32, #tpu.memory_space<vmem>>, vector<1x3xf32>
    %cst = arith.constant 0.000000e+00 : bf16
    %6 = vector.broadcast %cst : bf16 to vector<1x32xbf16>
    %c0_11 = arith.constant 0 : index
    %c0_12 = arith.constant 0 : index
    %c0_13 = arith.constant 0 : index
    %7 = vector.load %arg1[%c0_11, %c0_12, %c0_13] : memref<1x20x4xbf16, #tpu.memory_space<vmem>>, vector<1x20x4xbf16>
    %8 = vector.shape_cast %7 : vector<1x20x4xbf16> to vector<20x4xbf16>
    %9 = vector.extract_strided_slice %8 {offsets = [0, 0], sizes = [16, 4], strides = [1, 1]} : vector<20x4xbf16> to vector<16x4xbf16>
    %c0_14 = arith.constant 0 : index
    %c0_15 = arith.constant 0 : index
    %c0_16 = arith.constant 0 : index
    %10 = vector.load %arg2[%c0_14, %c0_15, %c0_16] : memref<5x4x32xbf16, #tpu.memory_space<vmem>>, vector<1x4x32xbf16>
    %11 = vector.shape_cast %10 : vector<1x4x32xbf16> to vector<4x32xbf16>
    %cst_17 = arith.constant dense<0.000000e+00> : vector<16x32xf32>
    %12 = tpu.matmul %9, %11, %cst_17 {dimension_numbers = #tpu.dot_dimension_numbers<[1], [0], [0], [1], [0, 0, 1, 1], [], []>} : vector<16x4xbf16>, vector<4x32xbf16>, vector<16x32xf32> -> vector<16x32xf32>
    %13 = vector.extract_strided_slice %8 {offsets = [1, 0], sizes = [16, 4], strides = [1, 1]} : vector<20x4xbf16> to vector<16x4xbf16>
    %c1 = arith.constant 1 : index
    %c0_18 = arith.constant 0 : index
    %c0_19 = arith.constant 0 : index
    %14 = vector.load %arg2[%c1, %c0_18, %c0_19] : memref<5x4x32xbf16, #tpu.memory_space<vmem>>, vector<1x4x32xbf16>
    %15 = vector.shape_cast %14 : vector<1x4x32xbf16> to vector<4x32xbf16>
    %cst_20 = arith.constant dense<0.000000e+00> : vector<16x32xf32>
    %16 = tpu.matmul %13, %15, %cst_20 {dimension_numbers = #tpu.dot_dimension_numbers<[1], [0], [0], [1], [0, 0, 1, 1], [], []>} : vector<16x4xbf16>, vector<4x32xbf16>, vector<16x32xf32> -> vector<16x32xf32>
    %17 = arith.addf %12, %16 : vector<16x32xf32>
    %18 = vector.extract_strided_slice %8 {offsets = [2, 0], sizes = [16, 4], strides = [1, 1]} : vector<20x4xbf16> to vector<16x4xbf16>
    %c2 = arith.constant 2 : index
    %c0_21 = arith.constant 0 : index
    %c0_22 = arith.constant 0 : index
    %19 = vector.load %arg2[%c2, %c0_21, %c0_22] : memref<5x4x32xbf16, #tpu.memory_space<vmem>>, vector<1x4x32xbf16>
    %20 = vector.shape_cast %19 : vector<1x4x32xbf16> to vector<4x32xbf16>
    %cst_23 = arith.constant dense<0.000000e+00> : vector<16x32xf32>
    %21 = tpu.matmul %18, %20, %cst_23 {dimension_numbers = #tpu.dot_dimension_numbers<[1], [0], [0], [1], [0, 0, 1, 1], [], []>} : vector<16x4xbf16>, vector<4x32xbf16>, vector<16x32xf32> -> vector<16x32xf32>
    %22 = arith.addf %17, %21 : vector<16x32xf32>
    %23 = vector.extract_strided_slice %8 {offsets = [3, 0], sizes = [16, 4], strides = [1, 1]} : vector<20x4xbf16> to vector<16x4xbf16>
    %c3 = arith.constant 3 : index
    %c0_24 = arith.constant 0 : index
    %c0_25 = arith.constant 0 : index
    %24 = vector.load %arg2[%c3, %c0_24, %c0_25] : memref<5x4x32xbf16, #tpu.memory_space<vmem>>, vector<1x4x32xbf16>
    %25 = vector.shape_cast %24 : vector<1x4x32xbf16> to vector<4x32xbf16>
    %cst_26 = arith.constant dense<0.000000e+00> : vector<16x32xf32>
    %26 = tpu.matmul %23, %25, %cst_26 {dimension_numbers = #tpu.dot_dimension_numbers<[1], [0], [0], [1], [0, 0, 1, 1], [], []>} : vector<16x4xbf16>, vector<4x32xbf16>, vector<16x32xf32> -> vector<16x32xf32>
    %27 = arith.addf %22, %26 : vector<16x32xf32>
    %28 = vector.extract_strided_slice %8 {offsets = [4, 0], sizes = [16, 4], strides = [1, 1]} : vector<20x4xbf16> to vector<16x4xbf16>
    %c4 = arith.constant 4 : index
    %c0_27 = arith.constant 0 : index
    %c0_28 = arith.constant 0 : index
    %29 = vector.load %arg2[%c4, %c0_27, %c0_28] : memref<5x4x32xbf16, #tpu.memory_space<vmem>>, vector<1x4x32xbf16>
    %30 = vector.shape_cast %29 : vector<1x4x32xbf16> to vector<4x32xbf16>
    %cst_29 = arith.constant dense<0.000000e+00> : vector<16x32xf32>
    %31 = tpu.matmul %28, %30, %cst_29 {dimension_numbers = #tpu.dot_dimension_numbers<[1], [0], [0], [1], [0, 0, 1, 1], [], []>} : vector<16x4xbf16>, vector<4x32xbf16>, vector<16x32xf32> -> vector<16x32xf32>
    %32 = arith.addf %27, %31 : vector<16x32xf32>
    %33 = vector.broadcast %0 : vector<1x32xf32> to vector<16x32xf32>
    %34 = arith.mulf %32, %33 : vector<16x32xf32>
    %35 = vector.broadcast %1 : vector<1x32xf32> to vector<16x32xf32>
    %36 = arith.addf %34, %35 : vector<16x32xf32>
    %cst_30 = arith.constant 0.000000e+00 : f32
    %37 = vector.broadcast %cst_30 : f32 to vector<16x32xf32>
    %38 = arith.maximumf %36, %37 : vector<16x32xf32>
    %39 = vector.extract_strided_slice %38 {offsets = [0, 0], sizes = [1, 32], strides = [1, 1]} : vector<16x32xf32> to vector<1x32xf32>
    %40 = vector.extract_strided_slice %38 {offsets = [0, 0], sizes = [15, 32], strides = [1, 1]} : vector<16x32xf32> to vector<15x32xf32>
    %41 = tpu.concatenate %39, %40 in 0 : vector<1x32xf32>, vector<15x32xf32> -> vector<16x32xf32>
    %42 = vector.extract_strided_slice %38 {offsets = [1, 0], sizes = [15, 32], strides = [1, 1]} : vector<16x32xf32> to vector<15x32xf32>
    %43 = vector.extract_strided_slice %38 {offsets = [15, 0], sizes = [1, 32], strides = [1, 1]} : vector<16x32xf32> to vector<1x32xf32>
    %44 = tpu.concatenate %42, %43 in 0 : vector<15x32xf32>, vector<1x32xf32> -> vector<16x32xf32>
    %cst_31 = arith.constant 7.500000e-01 : f32
    %45 = vector.broadcast %cst_31 : f32 to vector<16x32xf32>
    %46 = arith.mulf %45, %38 : vector<16x32xf32>
    %cst_32 = arith.constant 2.500000e-01 : f32
    %47 = vector.broadcast %cst_32 : f32 to vector<16x32xf32>
    %48 = arith.mulf %47, %41 : vector<16x32xf32>
    %49 = arith.addf %46, %48 : vector<16x32xf32>
    %50 = arith.truncf %49 : vector<16x32xf32> to vector<16x32xbf16>
    %cst_33 = arith.constant 7.500000e-01 : f32
    %51 = vector.broadcast %cst_33 : f32 to vector<16x32xf32>
    %52 = arith.mulf %51, %38 : vector<16x32xf32>
    %cst_34 = arith.constant 2.500000e-01 : f32
    %53 = vector.broadcast %cst_34 : f32 to vector<16x32xf32>
    %54 = arith.mulf %53, %44 : vector<16x32xf32>
    %55 = arith.addf %52, %54 : vector<16x32xf32>
    %56 = arith.truncf %55 : vector<16x32xf32> to vector<16x32xbf16>
    %57 = vector.extract_strided_slice %56 {offsets = [0, 0], sizes = [15, 32], strides = [1, 1]} : vector<16x32xbf16> to vector<15x32xbf16>
    %58 = tpu.concatenate %6, %57 in 0 : vector<1x32xbf16>, vector<15x32xbf16> -> vector<16x32xbf16>
    %59 = vector.extract_strided_slice %50 {offsets = [1, 0], sizes = [15, 32], strides = [1, 1]} : vector<16x32xbf16> to vector<15x32xbf16>
    %60 = tpu.concatenate %59, %6 in 0 : vector<15x32xbf16>, vector<1x32xbf16> -> vector<16x32xbf16>
    %c0_35 = arith.constant 0 : index
    %c0_36 = arith.constant 0 : index
    %c0_37 = arith.constant 0 : index
    %61 = vector.load %arg5[%c0_35, %c0_36, %c0_37] : memref<3x32x16xbf16, #tpu.memory_space<vmem>>, vector<1x32x16xbf16>
    %62 = vector.shape_cast %61 : vector<1x32x16xbf16> to vector<32x16xbf16>
    %cst_38 = arith.constant dense<0.000000e+00> : vector<16x16xf32>
    %63 = tpu.matmul %58, %62, %cst_38 {dimension_numbers = #tpu.dot_dimension_numbers<[1], [0], [0], [1], [0, 0, 1, 1], [], []>} : vector<16x32xbf16>, vector<32x16xbf16>, vector<16x16xf32> -> vector<16x16xf32>
    %c1_39 = arith.constant 1 : index
    %c0_40 = arith.constant 0 : index
    %c0_41 = arith.constant 0 : index
    %64 = vector.load %arg5[%c1_39, %c0_40, %c0_41] : memref<3x32x16xbf16, #tpu.memory_space<vmem>>, vector<1x32x16xbf16>
    %65 = vector.shape_cast %64 : vector<1x32x16xbf16> to vector<32x16xbf16>
    %cst_42 = arith.constant dense<0.000000e+00> : vector<16x16xf32>
    %66 = tpu.matmul %50, %65, %cst_42 {dimension_numbers = #tpu.dot_dimension_numbers<[1], [0], [0], [1], [0, 0, 1, 1], [], []>} : vector<16x32xbf16>, vector<32x16xbf16>, vector<16x16xf32> -> vector<16x16xf32>
    %67 = arith.addf %63, %66 : vector<16x16xf32>
    %c2_43 = arith.constant 2 : index
    %c0_44 = arith.constant 0 : index
    %c0_45 = arith.constant 0 : index
    %68 = vector.load %arg5[%c2_43, %c0_44, %c0_45] : memref<3x32x16xbf16, #tpu.memory_space<vmem>>, vector<1x32x16xbf16>
    %69 = vector.shape_cast %68 : vector<1x32x16xbf16> to vector<32x16xbf16>
    %cst_46 = arith.constant dense<0.000000e+00> : vector<16x16xf32>
    %70 = tpu.matmul %56, %69, %cst_46 {dimension_numbers = #tpu.dot_dimension_numbers<[1], [0], [0], [1], [0, 0, 1, 1], [], []>} : vector<16x32xbf16>, vector<32x16xbf16>, vector<16x16xf32> -> vector<16x16xf32>
    %71 = arith.addf %67, %70 : vector<16x16xf32>
    %c0_47 = arith.constant 0 : index
    %c0_48 = arith.constant 0 : index
    %c0_49 = arith.constant 0 : index
    %72 = vector.load %arg5[%c0_47, %c0_48, %c0_49] : memref<3x32x16xbf16, #tpu.memory_space<vmem>>, vector<1x32x16xbf16>
    %73 = vector.shape_cast %72 : vector<1x32x16xbf16> to vector<32x16xbf16>
    %cst_50 = arith.constant dense<0.000000e+00> : vector<16x16xf32>
    %74 = tpu.matmul %50, %73, %cst_50 {dimension_numbers = #tpu.dot_dimension_numbers<[1], [0], [0], [1], [0, 0, 1, 1], [], []>} : vector<16x32xbf16>, vector<32x16xbf16>, vector<16x16xf32> -> vector<16x16xf32>
    %c1_51 = arith.constant 1 : index
    %c0_52 = arith.constant 0 : index
    %c0_53 = arith.constant 0 : index
    %75 = vector.load %arg5[%c1_51, %c0_52, %c0_53] : memref<3x32x16xbf16, #tpu.memory_space<vmem>>, vector<1x32x16xbf16>
    %76 = vector.shape_cast %75 : vector<1x32x16xbf16> to vector<32x16xbf16>
    %cst_54 = arith.constant dense<0.000000e+00> : vector<16x16xf32>
    %77 = tpu.matmul %56, %76, %cst_54 {dimension_numbers = #tpu.dot_dimension_numbers<[1], [0], [0], [1], [0, 0, 1, 1], [], []>} : vector<16x32xbf16>, vector<32x16xbf16>, vector<16x16xf32> -> vector<16x16xf32>
    %78 = arith.addf %74, %77 : vector<16x16xf32>
    %c2_55 = arith.constant 2 : index
    %c0_56 = arith.constant 0 : index
    %c0_57 = arith.constant 0 : index
    %79 = vector.load %arg5[%c2_55, %c0_56, %c0_57] : memref<3x32x16xbf16, #tpu.memory_space<vmem>>, vector<1x32x16xbf16>
    %80 = vector.shape_cast %79 : vector<1x32x16xbf16> to vector<32x16xbf16>
    %cst_58 = arith.constant dense<0.000000e+00> : vector<16x16xf32>
    %81 = tpu.matmul %60, %80, %cst_58 {dimension_numbers = #tpu.dot_dimension_numbers<[1], [0], [0], [1], [0, 0, 1, 1], [], []>} : vector<16x32xbf16>, vector<32x16xbf16>, vector<16x16xf32> -> vector<16x16xf32>
    %82 = arith.addf %78, %81 : vector<16x16xf32>
    %83 = vector.broadcast %2 : vector<1x16xf32> to vector<16x16xf32>
    %84 = arith.mulf %71, %83 : vector<16x16xf32>
    %85 = vector.broadcast %3 : vector<1x16xf32> to vector<16x16xf32>
    %86 = arith.addf %84, %85 : vector<16x16xf32>
    %cst_59 = arith.constant 0.000000e+00 : f32
    %87 = vector.broadcast %cst_59 : f32 to vector<16x16xf32>
    %88 = arith.maximumf %86, %87 : vector<16x16xf32>
    %89 = arith.truncf %88 : vector<16x16xf32> to vector<16x16xbf16>
    %90 = vector.broadcast %2 : vector<1x16xf32> to vector<16x16xf32>
    %91 = arith.mulf %82, %90 : vector<16x16xf32>
    %92 = vector.broadcast %3 : vector<1x16xf32> to vector<16x16xf32>
    %93 = arith.addf %91, %92 : vector<16x16xf32>
    %cst_60 = arith.constant 0.000000e+00 : f32
    %94 = vector.broadcast %cst_60 : f32 to vector<16x16xf32>
    %95 = arith.maximumf %93, %94 : vector<16x16xf32>
    %96 = arith.truncf %95 : vector<16x16xf32> to vector<16x16xbf16>
    %cst_61 = arith.constant dense<0.000000e+00> : vector<16x3xf32>
    %97 = tpu.matmul %89, %4, %cst_61 {dimension_numbers = #tpu.dot_dimension_numbers<[1], [0], [0], [1], [0, 0, 1, 1], [], []>} : vector<16x16xbf16>, vector<16x3xbf16>, vector<16x3xf32> -> vector<16x3xf32>
    %98 = vector.broadcast %5 : vector<1x3xf32> to vector<16x3xf32>
    %99 = arith.addf %97, %98 : vector<16x3xf32>
    %cst_62 = arith.constant dense<0.000000e+00> : vector<16x3xf32>
    %100 = tpu.matmul %96, %4, %cst_62 {dimension_numbers = #tpu.dot_dimension_numbers<[1], [0], [0], [1], [0, 0, 1, 1], [], []>} : vector<16x16xbf16>, vector<16x3xbf16>, vector<16x3xf32> -> vector<16x3xf32>
    %101 = vector.broadcast %5 : vector<1x3xf32> to vector<16x3xf32>
    %102 = arith.addf %100, %101 : vector<16x3xf32>
    %103 = tpu.transpose %99, [1, 0] : vector<16x3xf32> -> vector<3x16xf32>
    %104 = tpu.transpose %102, [1, 0] : vector<16x3xf32> -> vector<3x16xf32>
    %105 = vector.extract_strided_slice %103 {offsets = [0, 0], sizes = [3, 1], strides = [1, 1]} : vector<3x16xf32> to vector<3x1xf32>
    %106 = vector.extract_strided_slice %104 {offsets = [0, 0], sizes = [3, 15], strides = [1, 1]} : vector<3x16xf32> to vector<3x15xf32>
    %107 = tpu.concatenate %105, %106 in 1 : vector<3x1xf32>, vector<3x15xf32> -> vector<3x16xf32>
    %108 = vector.extract_strided_slice %103 {offsets = [0, 1], sizes = [3, 15], strides = [1, 1]} : vector<3x16xf32> to vector<3x15xf32>
    %109 = vector.extract_strided_slice %104 {offsets = [0, 15], sizes = [3, 1], strides = [1, 1]} : vector<3x16xf32> to vector<3x1xf32>
    %110 = tpu.concatenate %108, %109 in 1 : vector<3x15xf32>, vector<3x1xf32> -> vector<3x16xf32>
    %cst_63 = arith.constant 7.500000e-01 : f32
    %111 = vector.broadcast %cst_63 : f32 to vector<3x16xf32>
    %112 = arith.mulf %111, %103 : vector<3x16xf32>
    %cst_64 = arith.constant 2.500000e-01 : f32
    %113 = vector.broadcast %cst_64 : f32 to vector<3x16xf32>
    %114 = arith.mulf %113, %107 : vector<3x16xf32>
    %115 = arith.addf %112, %114 : vector<3x16xf32>
    %c0_65 = arith.constant 0 : index
    %c0_66 = arith.constant 0 : index
    %c0_67 = arith.constant 0 : index
    %c0_68 = arith.constant 0 : index
    %116 = vector.load %arg10[%c0_65, %c0_66, %c0_67, %c0_68] : memref<1x3x4x16xf32, #tpu.memory_space<vmem>>, vector<1x3x1x16xf32>
    %117 = vector.shape_cast %116 : vector<1x3x1x16xf32> to vector<3x16xf32>
    %118 = vector.shape_cast %115 : vector<3x16xf32> to vector<1x3x1x16xf32>
    tpu.vector_store %arg10[%c0_65, %c0_66, %c0_67, %c0_68], %118 {strides = array<i32>} : memref<1x3x4x16xf32, #tpu.memory_space<vmem>>, vector<1x3x1x16xf32>,
    %cst_69 = arith.constant 7.500000e-01 : f32
    %119 = vector.broadcast %cst_69 : f32 to vector<3x16xf32>
    %120 = arith.mulf %119, %103 : vector<3x16xf32>
    %cst_70 = arith.constant 2.500000e-01 : f32
    %121 = vector.broadcast %cst_70 : f32 to vector<3x16xf32>
    %122 = arith.mulf %121, %104 : vector<3x16xf32>
    %123 = arith.addf %120, %122 : vector<3x16xf32>
    %c0_71 = arith.constant 0 : index
    %c0_72 = arith.constant 0 : index
    %c1_73 = arith.constant 1 : index
    %c0_74 = arith.constant 0 : index
    %124 = vector.load %arg10[%c0_71, %c0_72, %c1_73, %c0_74] : memref<1x3x4x16xf32, #tpu.memory_space<vmem>>, vector<1x3x1x16xf32>
    %125 = vector.shape_cast %124 : vector<1x3x1x16xf32> to vector<3x16xf32>
    %126 = vector.shape_cast %123 : vector<3x16xf32> to vector<1x3x1x16xf32>
    tpu.vector_store %arg10[%c0_71, %c0_72, %c1_73, %c0_74], %126 {strides = array<i32>} : memref<1x3x4x16xf32, #tpu.memory_space<vmem>>, vector<1x3x1x16xf32>,
    %cst_75 = arith.constant 2.500000e-01 : f32
    %127 = vector.broadcast %cst_75 : f32 to vector<3x16xf32>
    %128 = arith.mulf %127, %103 : vector<3x16xf32>
    %cst_76 = arith.constant 7.500000e-01 : f32
    %129 = vector.broadcast %cst_76 : f32 to vector<3x16xf32>
    %130 = arith.mulf %129, %104 : vector<3x16xf32>
    %131 = arith.addf %128, %130 : vector<3x16xf32>
    %c0_77 = arith.constant 0 : index
    %c0_78 = arith.constant 0 : index
    %c2_79 = arith.constant 2 : index
    %c0_80 = arith.constant 0 : index
    %132 = vector.load %arg10[%c0_77, %c0_78, %c2_79, %c0_80] : memref<1x3x4x16xf32, #tpu.memory_space<vmem>>, vector<1x3x1x16xf32>
    %133 = vector.shape_cast %132 : vector<1x3x1x16xf32> to vector<3x16xf32>
    %134 = vector.shape_cast %131 : vector<3x16xf32> to vector<1x3x1x16xf32>
    tpu.vector_store %arg10[%c0_77, %c0_78, %c2_79, %c0_80], %134 {strides = array<i32>} : memref<1x3x4x16xf32, #tpu.memory_space<vmem>>, vector<1x3x1x16xf32>,
    %cst_81 = arith.constant 7.500000e-01 : f32
    %135 = vector.broadcast %cst_81 : f32 to vector<3x16xf32>
    %136 = arith.mulf %135, %104 : vector<3x16xf32>
    %cst_82 = arith.constant 2.500000e-01 : f32
    %137 = vector.broadcast %cst_82 : f32 to vector<3x16xf32>
    %138 = arith.mulf %137, %110 : vector<3x16xf32>
    %139 = arith.addf %136, %138 : vector<3x16xf32>
    %c0_83 = arith.constant 0 : index
    %c0_84 = arith.constant 0 : index
    %c3_85 = arith.constant 3 : index
    %c0_86 = arith.constant 0 : index
    %140 = vector.load %arg10[%c0_83, %c0_84, %c3_85, %c0_86] : memref<1x3x4x16xf32, #tpu.memory_space<vmem>>, vector<1x3x1x16xf32>
    %141 = vector.shape_cast %140 : vector<1x3x1x16xf32> to vector<3x16xf32>
    %142 = vector.shape_cast %139 : vector<3x16xf32> to vector<1x3x1x16xf32>
    tpu.vector_store %arg10[%c0_83, %c0_84, %c3_85, %c0_86], %142 {strides = array<i32>} : memref<1x3x4x16xf32, #tpu.memory_space<vmem>>, vector<1x3x1x16xf32>,
    return
  }
  func.func @transform_0(%arg0: i32) -> (i32, i32, i32) {
    %c0_i32 = arith.constant 0 : i32
    %c0_i32_0 = arith.constant 0 : i32
    %c0_i32_1 = arith.constant 0 : i32
    return %arg0, %c0_i32, %c0_i32_0 : i32, i32, i32
  }
  func.func @transform_1(%arg0: i32) -> (i32, i32, i32) {
    %c0_i32 = arith.constant 0 : i32
    %c0_i32_0 = arith.constant 0 : i32
    %c0_i32_1 = arith.constant 0 : i32
    %c0_i32_2 = arith.constant 0 : i32
    return %c0_i32, %c0_i32_0, %c0_i32_1 : i32, i32, i32
  }
  func.func @transform_2(%arg0: i32) -> (i32, i32) {
    %c0_i32 = arith.constant 0 : i32
    %c0_i32_0 = arith.constant 0 : i32
    %c0_i32_1 = arith.constant 0 : i32
    return %c0_i32, %c0_i32_0 : i32, i32
  }
  func.func @transform_3(%arg0: i32) -> (i32, i32) {
    %c0_i32 = arith.constant 0 : i32
    %c0_i32_0 = arith.constant 0 : i32
    %c0_i32_1 = arith.constant 0 : i32
    return %c0_i32, %c0_i32_0 : i32, i32
  }
  func.func @transform_4(%arg0: i32) -> (i32, i32, i32) {
    %c0_i32 = arith.constant 0 : i32
    %c0_i32_0 = arith.constant 0 : i32
    %c0_i32_1 = arith.constant 0 : i32
    %c0_i32_2 = arith.constant 0 : i32
    return %c0_i32, %c0_i32_0, %c0_i32_1 : i32, i32, i32
  }
  func.func @transform_5(%arg0: i32) -> (i32, i32) {
    %c0_i32 = arith.constant 0 : i32
    %c0_i32_0 = arith.constant 0 : i32
    %c0_i32_1 = arith.constant 0 : i32
    return %c0_i32, %c0_i32_0 : i32, i32
  }
  func.func @transform_6(%arg0: i32) -> (i32, i32) {
    %c0_i32 = arith.constant 0 : i32
    %c0_i32_0 = arith.constant 0 : i32
    %c0_i32_1 = arith.constant 0 : i32
    return %c0_i32, %c0_i32_0 : i32, i32
  }
  func.func @transform_7(%arg0: i32) -> (i32, i32) {
    %c0_i32 = arith.constant 0 : i32
    %c0_i32_0 = arith.constant 0 : i32
    %c0_i32_1 = arith.constant 0 : i32
    return %c0_i32, %c0_i32_0 : i32, i32
  }
  func.func @transform_8(%arg0: i32) -> (i32, i32) {
    %c0_i32 = arith.constant 0 : i32
    %c0_i32_0 = arith.constant 0 : i32
    %c0_i32_1 = arith.constant 0 : i32
    return %c0_i32, %c0_i32_0 : i32, i32
  }
  func.func @transform_9(%arg0: i32) -> (i32, i32, i32, i32) {
    %c0_i32 = arith.constant 0 : i32
    %c0_i32_0 = arith.constant 0 : i32
    %c0_i32_1 = arith.constant 0 : i32
    %c0_i32_2 = arith.constant 0 : i32
    return %arg0, %c0_i32, %c0_i32_0, %c0_i32_1 : i32, i32, i32, i32
  }
}

</mosaic_0001>

<llo_original>
// kernel: cnn_ts_dec_forward.1
$region0: #{cnn_ts_dec_forward.1}
  #allocation0 [shape = 'u32[]', space=smem, size = 0x4, offset = 0x4, fixed_abs, tag = 'smem constant byte address 0x4 - core index']
  #allocation1 [shape = 'u32[144,128]{1,0:T(1,128)}', space=vmem, size = 0x12000, scoped, tag = 'internal scratch']
  %s0 = inlined_call_operand.vmem [shape: bf16[2,20,4], index: 0, kind: input, shape index: {}]
  %s1 = inlined_call_operand.vmem [shape: bf16[5,4,32], index: 1, kind: input, shape index: {}]
  %s2 = inlined_call_operand.vmem [shape: f32[1,32], index: 2, kind: input, shape index: {}]
  %s3 = inlined_call_operand.vmem [shape: f32[1,32], index: 3, kind: input, shape index: {}]
  %s4 = inlined_call_operand.vmem [shape: bf16[3,32,16], index: 4, kind: input, shape index: {}]
  %s5 = inlined_call_operand.vmem [shape: f32[1,16], index: 5, kind: input, shape index: {}]
  %s6 = inlined_call_operand.vmem [shape: f32[1,16], index: 6, kind: input, shape index: {}]
  %s7 = inlined_call_operand.vmem [shape: bf16[16,3], index: 7, kind: input, shape index: {}]
  %s8 = inlined_call_operand.vmem [shape: f32[1,3], index: 8, kind: input, shape index: {}]
  %s9 = inlined_call_operand.vmem [shape: f32[2,3,4,16], index: 9, kind: output, shape index: {}]
  %s10 = sld [smem:[#allocation0]]
  $region69: #{cnn_ts_dec_forward.1} parent=0
    _
  %s12 = ssub.s32 1, %s10
  %s13 = scalar_select 0, %s12, %s10
  loop: start=0, step=1, limit=4
  $region2: #{cnn_ts_dec_forward.1} parent=0 // loop_pre_header
    _
  $region3: #{cnn_ts_dec_forward.1} parent=0 // loop_header
    %s15 = sphi 0, %s19
    %p16 = scmp.ge.s32.totalorder %s15, 4
    %s25 = sphi 0, %s27
    %s28 = sphi 0, %s25
    %s29 = sphi 0, %s28
    %s45 = sphi 0, %s29
    %s49 = sphi 0, %s49
    %s51 = sphi 0, %s49
    %s52 = sphi 0, %s51
    %s66 = sphi 0, %s52
    %s70 = sphi 0, %s70
    %s72 = sphi 0, %s70
    %s73 = sphi 0, %s72
    %s87 = sphi 0, %s73
    %s91 = sphi 0, %s91
    %s93 = sphi 0, %s91
    %s94 = sphi 0, %s93
    %s108 = sphi 0, %s94
    %s112 = sphi 0, %s112
    %s114 = sphi 0, %s112
    %s115 = sphi 0, %s114
    %s129 = sphi 0, %s115
    %s133 = sphi 0, %s133
    %s135 = sphi 0, %s133
    %s136 = sphi 0, %s135
    %s150 = sphi 0, %s136
    %s154 = sphi 0, %s154
    %s156 = sphi 0, %s154
    %s157 = sphi 0, %s156
    %s171 = sphi 0, %s157
    %s175 = sphi 0, %s175
    %s177 = sphi 0, %s175
    %s178 = sphi 0, %s177
    %s192 = sphi 0, %s178
    %s196 = sphi 0, %s196
    %s198 = sphi 0, %s196
    %s199 = sphi 0, %s198
    %s213 = sphi 0, %s199
    %s219 = sphi 0, %s221
    %s222 = sphi 0, %s219
    %s223 = sphi 0, %s222
    %s239 = sphi 0, %s223
  $region4: #{cnn_ts_dec_forward.1} parent=0 // loop_header_branch
    %18 = sbr.rel (%p16) target = $region8
  $region5: #{cnn_ts_dec_forward.1} parent=0 // loop_body
    %s20 = ssub.s32 %s15, 1
    %s21 = ssub.s32 %s15, 2
    %s22 = sadd.s32 %s15, 1
    %s23 = ssub.s32 %s15, %s22
    %p24 = scmp.eq.s32.totalorder %s23, 0
    %s26 = sadd.s32 %s25, 1
    %s27 = scalar_select %p24, %s25, %s26
    %p30 = pneg %p24
    %p31 = scmp.eq.s32.totalorder %s15, 1
    %p32 = por %p30, %p31
    %p33 = scmp.ne.s32.totalorder %s25, %s28
    %p34 = scmp.eq.s32.totalorder %s15, 0
    %p35 = por %p33, %p34
    %p36 = scmp.ne.s32.totalorder %s25, %s28
    %p37 = scmp.eq.s32.totalorder %s20, 1
    %p38 = por %p36, %p37
    %p39 = scmp.ne.s32.totalorder %s28, %s29
    %p40 = scmp.eq.s32.totalorder %s20, 0
    %p41 = por %p39, %p40
    %p42 = scmp.ne.s32.totalorder %s28, %s29
    %p43 = scmp.eq.s32.totalorder %s21, 1
    %p44 = por %p42, %p43
    %p46 = scmp.ne.s32.totalorder %s29, %s45
    %p47 = scmp.eq.s32.totalorder %s21, 0
    %p48 = por %p46, %p47
    %s50 = sadd.s32 %s49, 1
    %p53 = scmp.eq.s32.totalorder %s15, 1
    %p54 = scmp.ne.s32.totalorder %s49, %s51
    %p55 = scmp.eq.s32.totalorder %s15, 0
    %p56 = por %p54, %p55
    %p57 = scmp.ne.s32.totalorder %s49, %s51
    %p58 = scmp.eq.s32.totalorder %s20, 1
    %p59 = por %p57, %p58
    %p60 = scmp.ne.s32.totalorder %s51, %s52
    %p61 = scmp.eq.s32.totalorder %s20, 0
    %p62 = por %p60, %p61
    %p63 = scmp.ne.s32.totalorder %s51, %s52
    %p64 = scmp.eq.s32.totalorder %s21, 1
    %p65 = por %p63, %p64
    %p67 = scmp.ne.s32.totalorder %s52, %s66
    %p68 = scmp.eq.s32.totalorder %s21, 0
    %p69 = por %p67, %p68
    %s71 = sadd.s32 %s70, 1
    %p74 = scmp.eq.s32.totalorder %s15, 1
    %p75 = scmp.ne.s32.totalorder %s70, %s72
    %p76 = scmp.eq.s32.totalorder %s15, 0
    %p77 = por %p75, %p76
    %p78 = scmp.ne.s32.totalorder %s70, %s72
    %p79 = scmp.eq.s32.totalorder %s20, 1
    %p80 = por %p78, %p79
    %p81 = scmp.ne.s32.totalorder %s72, %s73
    %p82 = scmp.eq.s32.totalorder %s20, 0
    %p83 = por %p81, %p82
    %p84 = scmp.ne.s32.totalorder %s72, %s73
    %p85 = scmp.eq.s32.totalorder %s21, 1
    %p86 = por %p84, %p85
    %p88 = scmp.ne.s32.totalorder %s73, %s87
    %p89 = scmp.eq.s32.totalorder %s21, 0
    %p90 = por %p88, %p89
    %s92 = sadd.s32 %s91, 1
    %p95 = scmp.eq.s32.totalorder %s15, 1
    %p96 = scmp.ne.s32.totalorder %s91, %s93
    %p97 = scmp.eq.s32.totalorder %s15, 0
    %p98 = por %p96, %p97
    %p99 = scmp.ne.s32.totalorder %s91, %s93
    %p100 = scmp.eq.s32.totalorder %s20, 1
    %p101 = por %p99, %p100
    %p102 = scmp.ne.s32.totalorder %s93, %s94
    %p103 = scmp.eq.s32.totalorder %s20, 0
    %p104 = por %p102, %p103
    %p105 = scmp.ne.s32.totalorder %s93, %s94
    %p106 = scmp.eq.s32.totalorder %s21, 1
    %p107 = por %p105, %p106
    %p109 = scmp.ne.s32.totalorder %s94, %s108
    %p110 = scmp.eq.s32.totalorder %s21, 0
    %p111 = por %p109, %p110
    %s113 = sadd.s32 %s112, 1
    %p116 = scmp.eq.s32.totalorder %s15, 1
    %p117 = scmp.ne.s32.totalorder %s112, %s114
    %p118 = scmp.eq.s32.totalorder %s15, 0
    %p119 = por %p117, %p118
    %p120 = scmp.ne.s32.totalorder %s112, %s114
    %p121 = scmp.eq.s32.totalorder %s20, 1
    %p122 = por %p120, %p121
    %p123 = scmp.ne.s32.totalorder %s114, %s115
    %p124 = scmp.eq.s32.totalorder %s20, 0
    %p125 = por %p123, %p124
    %p126 = scmp.ne.s32.totalorder %s114, %s115
    %p127 = scmp.eq.s32.totalorder %s21, 1
    %p128 = por %p126, %p127
    %p130 = scmp.ne.s32.totalorder %s115, %s129
    %p131 = scmp.eq.s32.totalorder %s21, 0
    %p132 = por %p130, %p131
    %s134 = sadd.s32 %s133, 1
    %p137 = scmp.eq.s32.totalorder %s15, 1
    %p138 = scmp.ne.s32.totalorder %s133, %s135
    %p139 = scmp.eq.s32.totalorder %s15, 0
    %p140 = por %p138, %p139
    %p141 = scmp.ne.s32.totalorder %s133, %s135
    %p142 = scmp.eq.s32.totalorder %s20, 1
    %p143 = por %p141, %p142
    %p144 = scmp.ne.s32.totalorder %s135, %s136
    %p145 = scmp.eq.s32.totalorder %s20, 0
    %p146 = por %p144, %p145
    %p147 = scmp.ne.s32.totalorder %s135, %s136
    %p148 = scmp.eq.s32.totalorder %s21, 1
    %p149 = por %p147, %p148
    %p151 = scmp.ne.s32.totalorder %s136, %s150
    %p152 = scmp.eq.s32.totalorder %s21, 0
    %p153 = por %p151, %p152
    %s155 = sadd.s32 %s154, 1
    %p158 = scmp.eq.s32.totalorder %s15, 1
    %p159 = scmp.ne.s32.totalorder %s154, %s156
    %p160 = scmp.eq.s32.totalorder %s15, 0
    %p161 = por %p159, %p160
    %p162 = scmp.ne.s32.totalorder %s154, %s156
    %p163 = scmp.eq.s32.totalorder %s20, 1
    %p164 = por %p162, %p163
    %p165 = scmp.ne.s32.totalorder %s156, %s157
    %p166 = scmp.eq.s32.totalorder %s20, 0
    %p167 = por %p165, %p166
    %p168 = scmp.ne.s32.totalorder %s156, %s157
    %p169 = scmp.eq.s32.totalorder %s21, 1
    %p170 = por %p168, %p169
    %p172 = scmp.ne.s32.totalorder %s157, %s171
    %p173 = scmp.eq.s32.totalorder %s21, 0
    %p174 = por %p172, %p173
    %s176 = sadd.s32 %s175, 1
    %p179 = scmp.eq.s32.totalorder %s15, 1
    %p180 = scmp.ne.s32.totalorder %s175, %s177
    %p181 = scmp.eq.s32.totalorder %s15, 0
    %p182 = por %p180, %p181
    %p183 = scmp.ne.s32.totalorder %s175, %s177
    %p184 = scmp.eq.s32.totalorder %s20, 1
    %p185 = por %p183, %p184
    %p186 = scmp.ne.s32.totalorder %s177, %s178
    %p187 = scmp.eq.s32.totalorder %s20, 0
    %p188 = por %p186, %p187
    %p189 = scmp.ne.s32.totalorder %s177, %s178
    %p190 = scmp.eq.s32.totalorder %s21, 1
    %p191 = por %p189, %p190
    %p193 = scmp.ne.s32.totalorder %s178, %s192
    %p194 = scmp.eq.s32.totalorder %s21, 0
    %p195 = por %p193, %p194
    %s197 = sadd.s32 %s196, 1
    %p200 = scmp.eq.s32.totalorder %s15, 1
    %p201 = scmp.ne.s32.totalorder %s196, %s198
    %p202 = scmp.eq.s32.totalorder %s15, 0
    %p203 = por %p201, %p202
    %p204 = scmp.ne.s32.totalorder %s196, %s198
    %p205 = scmp.eq.s32.totalorder %s20, 1
    %p206 = por %p204, %p205
    %p207 = scmp.ne.s32.totalorder %s198, %s199
    %p208 = scmp.eq.s32.totalorder %s20, 0
    %p209 = por %p207, %p208
    %p210 = scmp.ne.s32.totalorder %s198, %s199
    %p211 = scmp.eq.s32.totalorder %s21, 1
    %p212 = por %p210, %p211
    %p214 = scmp.ne.s32.totalorder %s199, %s213
    %p215 = scmp.eq.s32.totalorder %s21, 0
    %p216 = por %p214, %p215
    %s217 = ssub.s32 %s15, %s22
    %p218 = scmp.eq.s32.totalorder %s217, 0
    %s220 = sadd.s32 %s219, 1
    %s221 = scalar_select %p218, %s219, %s220
    %p224 = pneg %p218
    %p225 = scmp.eq.s32.totalorder %s15, 1
    %p226 = por %p224, %p225
    %p227 = scmp.ne.s32.totalorder %s219, %s222
    %p228 = scmp.eq.s32.totalorder %s15, 0
    %p229 = por %p227, %p228
    %p230 = scmp.ne.s32.totalorder %s219, %s222
    %p231 = scmp.eq.s32.totalorder %s20, 1
    %p232 = por %p230, %p231
    %p233 = scmp.ne.s32.totalorder %s222, %s223
    %p234 = scmp.eq.s32.totalorder %s20, 0
    %p235 = por %p233, %p234
    %p236 = scmp.ne.s32.totalorder %s222, %s223
    %p237 = scmp.eq.s32.totalorder %s21, 1
    %p238 = por %p236, %p237
    %p240 = scmp.ne.s32.totalorder %s223, %s239
    %p241 = scmp.eq.s32.totalorder %s21, 0
    %p242 = por %p240, %p241
    %p243 = scmp.le.s32.totalorder 1, %s15
    %p244 = scmp.lt.s32.totalorder %s15, 3
    %p245 = pnand %p243, %p244
    %p246 = pneg %p245
    // Predicated region
    $region9: #{cnn_ts_dec_forward.1} parent=5 // pred_check
      _
    $region10: #{cnn_ts_dec_forward.1} parent=5 // pred_check_branch
      %248 = sbr.rel (%p245) target = $region12
    $region11: #{cnn_ts_dec_forward.1} parent=5 // pred_region
      %s249 = ssub.s32 %s15, 1
      // Predicated region
      $region13: #{cnn_ts_dec_forward.1} parent=11 // pred_check
        %p250 = pneg %p62
      $region14: #{cnn_ts_dec_forward.1} parent=11 // pred_check_branch
        %252 = sbr.rel (%p250) target = $region16
      $region15: #{cnn_ts_dec_forward.1} parent=11 // pred_region
        _
      $region16: #{cnn_ts_dec_forward.1} parent=11 // pred_fallthru
        _
      // Predicated region
      $region17: #{cnn_ts_dec_forward.1} parent=11 // pred_check
        %p253 = pneg %p83
      $region18: #{cnn_ts_dec_forward.1} parent=11 // pred_check_branch
        %255 = sbr.rel (%p253) target = $region20
      $region19: #{cnn_ts_dec_forward.1} parent=11 // pred_region
        _
      $region20: #{cnn_ts_dec_forward.1} parent=11 // pred_fallthru
        _
      // Predicated region
      $region21: #{cnn_ts_dec_forward.1} parent=11 // pred_check
        %p256 = pneg %p104
      $region22: #{cnn_ts_dec_forward.1} parent=11 // pred_check_branch
        %258 = sbr.rel (%p256) target = $region24
      $region23: #{cnn_ts_dec_forward.1} parent=11 // pred_region
        _
      $region24: #{cnn_ts_dec_forward.1} parent=11 // pred_fallthru
        _
      // Predicated region
      $region25: #{cnn_ts_dec_forward.1} parent=11 // pred_check
        %p259 = pneg %p125
      $region26: #{cnn_ts_dec_forward.1} parent=11 // pred_check_branch
        %261 = sbr.rel (%p259) target = $region28
      $region27: #{cnn_ts_dec_forward.1} parent=11 // pred_region
        _
      $region28: #{cnn_ts_dec_forward.1} parent=11 // pred_fallthru
        _
      // Predicated region
      $region29: #{cnn_ts_dec_forward.1} parent=11 // pred_check
        %p262 = pneg %p146
      $region30: #{cnn_ts_dec_forward.1} parent=11 // pred_check_branch
        %264 = sbr.rel (%p262) target = $region32
      $region31: #{cnn_ts_dec_forward.1} parent=11 // pred_region
        _
      $region32: #{cnn_ts_dec_forward.1} parent=11 // pred_fallthru
        _
      // Predicated region
      $region33: #{cnn_ts_dec_forward.1} parent=11 // pred_check
        %p265 = pneg %p167
      $region34: #{cnn_ts_dec_forward.1} parent=11 // pred_check_branch
        %267 = sbr.rel (%p265) target = $region36
      $region35: #{cnn_ts_dec_forward.1} parent=11 // pred_region
        _
      $region36: #{cnn_ts_dec_forward.1} parent=11 // pred_fallthru
        _
      // Predicated region
      $region37: #{cnn_ts_dec_forward.1} parent=11 // pred_check
        %p268 = pneg %p188
      $region38: #{cnn_ts_dec_forward.1} parent=11 // pred_check_branch
        %270 = sbr.rel (%p268) target = $region40
      $region39: #{cnn_ts_dec_forward.1} parent=11 // pred_region
        _
      $region40: #{cnn_ts_dec_forward.1} parent=11 // pred_fallthru
        _
      // Predicated region
      $region41: #{cnn_ts_dec_forward.1} parent=11 // pred_check
        %p271 = pneg %p209
      $region42: #{cnn_ts_dec_forward.1} parent=11 // pred_check_branch
        %273 = sbr.rel (%p271) target = $region44
      $region43: #{cnn_ts_dec_forward.1} parent=11 // pred_region
        _
      $region44: #{cnn_ts_dec_forward.1} parent=11 // pred_fallthru
        _
    $region12: #{cnn_ts_dec_forward.1} parent=5 // pred_fallthru
      _
    %p274 = scmp.lt.s32.totalorder %s15, 2
    // Predicated region
    $region45: #{cnn_ts_dec_forward.1} parent=5 // pred_check
      %p275 = pneg %p274
    $region46: #{cnn_ts_dec_forward.1} parent=5 // pred_check_branch
      %277 = sbr.rel (%p275) target = $region48
    $region47: #{cnn_ts_dec_forward.1} parent=5 // pred_region
      // Predicated region
      $region49: #{cnn_ts_dec_forward.1} parent=47 // pred_check
        %p278 = pneg %p35
      $region50: #{cnn_ts_dec_forward.1} parent=47 // pred_check_branch
        %280 = sbr.rel (%p278) target = $region52
      $region51: #{cnn_ts_dec_forward.1} parent=47 // pred_region
        %p281 = scmp.lt.s32.totalorder %s15, 1
        %s282 = scalar_select %p281, %s15, 1
        %s283 = smul.addr %s282, 3
        %s284 = smul.addr %s283, 4
        %s285 = scalar_lea.vmem %s0, %s284
      $region52: #{cnn_ts_dec_forward.1} parent=47 // pred_fallthru
        _
    $region48: #{cnn_ts_dec_forward.1} parent=5 // pred_fallthru
      _
    %p286 = scmp.le.s32.totalorder 1, %s15
    %p287 = scmp.lt.s32.totalorder %s15, 3
    %p288 = pnand %p286, %p287
    %p289 = pneg %p288
    // Predicated region
    $region53: #{cnn_ts_dec_forward.1} parent=5 // pred_check
      _
    $region54: #{cnn_ts_dec_forward.1} parent=5 // pred_check_branch
      %291 = sbr.rel (%p288) target = $region56
    $region55: #{cnn_ts_dec_forward.1} parent=5 // pred_region
      %s292 = ssub.s32 %s15, 1
      %p293 = scmp.lt.s32.totalorder %s20, 1
      %s294 = scalar_select %p293, %s20, 1
      %s295 = smul.addr %s294, 3
      %s296 = smul.addr %s295, 4
      %s297 = scalar_lea.vmem %s0, %s296
      %p298 = pneg %p41
      %p299 = pneg %p38
      %p300 = pneg %p62
      %p301 = pneg %p59
      %p302 = pneg %p83
      %p303 = pneg %p80
      %p304 = pneg %p104
      %p305 = pneg %p101
      %p306 = pneg %p125
      %p307 = pneg %p122
      %p308 = pneg %p146
      %p309 = pneg %p143
      %p310 = pneg %p167
      %p311 = pneg %p164
      %p312 = pneg %p188
      %p313 = pneg %p185
      %p314 = pneg %p209
      %p315 = pneg %p206
      %p316 = pneg %p235
      %p317 = pneg %p232
      %p318 = scmp.lt.s32.totalorder %s20, 1
      %s319 = scalar_select %p318, %s20, 1
      %s320 = smul.addr %s319, 3
      %s321 = smul.addr %s320, 4
      %s322 = scalar_lea.vmem %s9, %s321
      %p323 = scmp.lt.s32.totalorder %s20, 1
      %s324 = scalar_select %p323, %s20, 1
      %s325 = smul.addr %s324, 3
      %s326 = smul.addr %s325, 4
      %s327 = scalar_lea.vmem %s0, %s326
      %p328 = scmp.lt.s32.totalorder %s20, 1
      %s329 = scalar_select %p328, %s20, 1
      %s330 = smul.addr %s329, 3
      %s331 = smul.addr %s330, 4
      %s332 = scalar_lea.vmem %s9, %s331
      %v334 = vld [vmem:[%s2] sm:$0x1]
      %v335 = vld [vmem:[%s3] sm:$0x1]
      %v336 = vld [vmem:[%s5] sm:$0x1]
      %v337 = vld [vmem:[%s6] sm:$0x1]
      %v338 = vld [vmem:[%s7] sm:$0xf]
      %v339 = vld [vmem:[%s7 + $0x4] sm:$0xf]
      %v340 = vld [vmem:[%s8] sm:$0x1]
      %v341 = vld [vmem:[%s327] sm:$0xf]
      %v342 = vld [vmem:[%s327 + $0x4] sm:$0xf]
      %v343 = vld [vmem:[%s327 + $0x8] sm:$0x3]
      %v344 = vld [vmem:[%s1] sm:$0x3]
      %s345 = scalar_lea.vmem %s1, 2
      %v346 = vld [vmem:[%s345] sm:$0x3]
      %v350 = vunpack.c.l.b16 %v341
      %v351 = vunpack.c.l.b16 %v342
      %v352 = vunpack.c.l.b16 %v343
      %v353 = vpack.c.b16 %v351, %v350
      %v354 = vpack.c.b16 %v352, %v352
      %vm355 = vsmask.f32 7424
      %v357 = vshrl.u32 %v353, 16
      %v359 = vshll.u32 %v353, 16
      %v361 = vrot.slane %v359, 1
      %v362 = vor.u32 %v357, %v361
      %v364 = vshll.u32 %v354, 16
      %v366 = vrot.slane %v364, 1
      %v367 = vsel %vm355, %v362, %v366
      %vm368 = vcmask 31744
      %v370 = vsel %vm368, %v367, 0
      %vm372 = vcmask 1041408
      %v374 = vsel %vm372, %v346, 0
      %376 = vmatprep.subr.bf16.mxu0 0
      %377 = vmatpush1.bf16.msra.mxu0 %v374
      %378 = vmatprep.subr.bf16.mxu0 0
      %379 = vmatpush1.bf16.msra.mxu0 0
      %380 = vmatprep.subr.bf16.mxu0 0
      %381 = vmatpush1.bf16.msra.mxu0 0
      %382 = vmatprep.subr.bf16.mxu0 0
      %383 = vmatpush1.bf16.msra.mxu0 0
      %384 = vmatprep.subr.bf16.mxu0 0
      %385 = vmatpush1.bf16.msra.mxu0 0
      %386 = vmatprep.subr.bf16.mxu0 0
      %387 = vmatpush1.bf16.msra.mxu0 0
      %388 = vmatprep.subr.bf16.mxu0 0
      %389 = vmatpush1.bf16.msra.mxu0 0
      %390 = vmatprep.subr.bf16.mxu0 0
      %391 = vmatpush1.bf16.msra.mxu0 0
      %392 = vmatprep.subr.bf16.mxu0 0
      %393 = vmatpush1.bf16.msra.mxu0 0
      %394 = vmatprep.subr.bf16.mxu0 0
      %395 = vmatpush1.bf16.msra.mxu0 0
      %396 = vmatprep.subr.bf16.mxu0 0
      %397 = vmatpush1.bf16.msra.mxu0 0
      %398 = vmatprep.subr.bf16.mxu0 0
      %399 = vmatpush1.bf16.msra.mxu0 0
      %400 = vmatprep.subr.bf16.mxu0 0
      %401 = vmatpush1.bf16.msra.mxu0 0
      %402 = vmatprep.subr.bf16.mxu0 0
      %403 = vmatpush1.bf16.msra.mxu0 0
      %404 = vmatprep.subr.bf16.mxu0 0
      %405 = vmatpush1.bf16.msra.mxu0 0
      %406 = vmatprep.subr.bf16.mxu0 0
      %407 = vmatpush1.bf16.msra.mxu0 0
      %408 = vmatprep.mubr.bf16.mxu0 0
      %409 = vmatmul.mubr.bf16.gmra.mrb[0].mxu0 %v370
      %v410 = vpop.f32.mrb[0].mxu0
      %v411 = vadd.f32 0.0, %v410
      %v412 = vpop.f32.mrb[0].mxu0
      %v413 = vpop.f32.mrb[0].mxu0
      %v414 = vadd.f32 0.0, %v413
      %v415 = vpop.f32.mrb[0].mxu0
      %416 = vdwg.mxu0
      %v417 = vsel %vm368, %v353, 0
      %v420 = vsel %vm372, %v344, 0
      %422 = vmatprep.subr.bf16.mxu0 0
      %423 = vmatpush1.bf16.msra.mxu0 %v420
      %424 = vmatprep.subr.bf16.mxu0 0
      %425 = vmatpush1.bf16.msra.mxu0 0
      %426 = vmatprep.subr.bf16.mxu0 0
      %427 = vmatpush1.bf16.msra.mxu0 0
      %428 = vmatprep.subr.bf16.mxu0 0
      %429 = vmatpush1.bf16.msra.mxu0 0
      %430 = vmatprep.subr.bf16.mxu0 0
      %431 = vmatpush1.bf16.msra.mxu0 0
      %432 = vmatprep.subr.bf16.mxu0 0
      %433 = vmatpush1.bf16.msra.mxu0 0
      %434 = vmatprep.subr.bf16.mxu0 0
      %435 = vmatpush1.bf16.msra.mxu0 0
      %436 = vmatprep.subr.bf16.mxu0 0
      %437 = vmatpush1.bf16.msra.mxu0 0
      %438 = vmatprep.subr.bf16.mxu0 0
      %439 = vmatpush1.bf16.msra.mxu0 0
      %440 = vmatprep.subr.bf16.mxu0 0
      %441 = vmatpush1.bf16.msra.mxu0 0
      %442 = vmatprep.subr.bf16.mxu0 0
      %443 = vmatpush1.bf16.msra.mxu0 0
      %444 = vmatprep.subr.bf16.mxu0 0
      %445 = vmatpush1.bf16.msra.mxu0 0
      %446 = vmatprep.subr.bf16.mxu0 0
      %447 = vmatpush1.bf16.msra.mxu0 0
      %448 = vmatprep.subr.bf16.mxu0 0
      %449 = vmatpush1.bf16.msra.mxu0 0
      %450 = vmatprep.subr.bf16.mxu0 0
      %451 = vmatpush1.bf16.msra.mxu0 0
      %452 = vmatprep.subr.bf16.mxu0 0
      %453 = vmatpush1.bf16.msra.mxu0 0
      %454 = vmatprep.mubr.bf16.mxu0 0
      %455 = vmatmul.mubr.bf16.gmra.mrb[0].mxu0 %v417
      %v456 = vpop.f32.mrb[0].mxu0
      %v457 = vadd.f32 %v411, %v456
      %v458 = vpop.f32.mrb[0].mxu0
      %v459 = vpop.f32.mrb[0].mxu0
      %v460 = vadd.f32 %v414, %v459
      %v461 = vpop.f32.mrb[0].mxu0
      %462 = vdwg.mxu0
      %s463 = scalar_lea.vmem %s1, 4
      %v464 = vld [vmem:[%s463] sm:$0x3]
      %vm465 = vcmask 1046528
      %v466 = vrot.slane %v353, 1
      %v467 = vrot.slane %v354, 1
      %v468 = vsel %vm465, %v466, %v467
      %v470 = vsel %vm368, %v468, 0
      %v473 = vsel %vm372, %v464, 0
      %475 = vmatprep.subr.bf16.mxu0 0
      %476 = vmatpush1.bf16.msra.mxu0 %v473
      %477 = vmatprep.subr.bf16.mxu0 0
      %478 = vmatpush1.bf16.msra.mxu0 0
      %479 = vmatprep.subr.bf16.mxu0 0
      %480 = vmatpush1.bf16.msra.mxu0 0
      %481 = vmatprep.subr.bf16.mxu0 0
      %482 = vmatpush1.bf16.msra.mxu0 0
      %483 = vmatprep.subr.bf16.mxu0 0
      %484 = vmatpush1.bf16.msra.mxu0 0
      %485 = vmatprep.subr.bf16.mxu0 0
      %486 = vmatpush1.bf16.msra.mxu0 0
      %487 = vmatprep.subr.bf16.mxu0 0
      %488 = vmatpush1.bf16.msra.mxu0 0
      %489 = vmatprep.subr.bf16.mxu0 0
      %490 = vmatpush1.bf16.msra.mxu0 0
      %491 = vmatprep.subr.bf16.mxu0 0
      %492 = vmatpush1.bf16.msra.mxu0 0
      %493 = vmatprep.subr.bf16.mxu0 0
      %494 = vmatpush1.bf16.msra.mxu0 0
      %495 = vmatprep.subr.bf16.mxu0 0
      %496 = vmatpush1.bf16.msra.mxu0 0
      %497 = vmatprep.subr.bf16.mxu0 0
      %498 = vmatpush1.bf16.msra.mxu0 0
      %499 = vmatprep.subr.bf16.mxu0 0
      %500 = vmatpush1.bf16.msra.mxu0 0
      %501 = vmatprep.subr.bf16.mxu0 0
      %502 = vmatpush1.bf16.msra.mxu0 0
      %503 = vmatprep.subr.bf16.mxu0 0
      %504 = vmatpush1.bf16.msra.mxu0 0
      %505 = vmatprep.subr.bf16.mxu0 0
      %506 = vmatpush1.bf16.msra.mxu0 0
      %507 = vmatprep.mubr.bf16.mxu0 0
      %508 = vmatmul.mubr.bf16.gmra.mrb[0].mxu0 %v470
      %v509 = vpop.f32.mrb[0].mxu0
      %v510 = vadd.f32 0.0, %v509
      %v511 = vpop.f32.mrb[0].mxu0
      %v512 = vpop.f32.mrb[0].mxu0
      %v513 = vadd.f32 0.0, %v512
      %v514 = vpop.f32.mrb[0].mxu0
      %515 = vdwg.mxu0
      %v516 = vadd.f32 %v457, %v510
      %v517 = vadd.f32 %v460, %v513
      %s518 = scalar_lea.vmem %s1, 6
      %v519 = vld [vmem:[%s518] sm:$0x3]
      %vm520 = vsmask.f32 6400
      %v521 = vrot.slane %v357, 1
      %v522 = vrot.slane %v359, 2
      %v523 = vor.u32 %v521, %v522
      %v524 = vshrl.u32 %v354, 16
      %v526 = vrot.slane %v524, 1
      %v527 = vrot.slane %v364, 2
      %v528 = vor.u32 %v526, %v527
      %v529 = vsel %vm520, %v523, %v528
      %v531 = vsel %vm368, %v529, 0
      %v534 = vsel %vm372, %v519, 0
      %536 = vmatprep.subr.bf16.mxu0 0
      %537 = vmatpush1.bf16.msra.mxu0 %v534
      %538 = vmatprep.subr.bf16.mxu0 0
      %539 = vmatpush1.bf16.msra.mxu0 0
      %540 = vmatprep.subr.bf16.mxu0 0
      %541 = vmatpush1.bf16.msra.mxu0 0
      %542 = vmatprep.subr.bf16.mxu0 0
      %543 = vmatpush1.bf16.msra.mxu0 0
      %544 = vmatprep.subr.bf16.mxu0 0
      %545 = vmatpush1.bf16.msra.mxu0 0
      %546 = vmatprep.subr.bf16.mxu0 0
      %547 = vmatpush1.bf16.msra.mxu0 0
      %548 = vmatprep.subr.bf16.mxu0 0
      %549 = vmatpush1.bf16.msra.mxu0 0
      %550 = vmatprep.subr.bf16.mxu0 0
      %551 = vmatpush1.bf16.msra.mxu0 0
      %552 = vmatprep.subr.bf16.mxu0 0
      %553 = vmatpush1.bf16.msra.mxu0 0
      %554 = vmatprep.subr.bf16.mxu0 0
      %555 = vmatpush1.bf16.msra.mxu0 0
      %556 = vmatprep.subr.bf16.mxu0 0
      %557 = vmatpush1.bf16.msra.mxu0 0
      %558 = vmatprep.subr.bf16.mxu0 0
      %559 = vmatpush1.bf16.msra.mxu0 0
      %560 = vmatprep.subr.bf16.mxu0 0
      %561 = vmatpush1.bf16.msra.mxu0 0
      %562 = vmatprep.subr.bf16.mxu0 0
      %563 = vmatpush1.bf16.msra.mxu0 0
      %564 = vmatprep.subr.bf16.mxu0 0
      %565 = vmatpush1.bf16.msra.mxu0 0
      %566 = vmatprep.subr.bf16.mxu0 0
      %567 = vmatpush1.bf16.msra.mxu0 0
      %568 = vmatprep.mubr.bf16.mxu0 0
      %569 = vmatmul.mubr.bf16.gmra.mrb[0].mxu0 %v531
      %v570 = vpop.f32.mrb[0].mxu0
      %v571 = vadd.f32 0.0, %v570
      %v572 = vpop.f32.mrb[0].mxu0
      %v573 = vpop.f32.mrb[0].mxu0
      %v574 = vadd.f32 0.0, %v573
      %v575 = vpop.f32.mrb[0].mxu0
      %576 = vdwg.mxu0
      %v577 = vadd.f32 %v516, %v571
      %v578 = vadd.f32 %v517, %v574
      %s579 = scalar_lea.vmem %s1, 8
      %v580 = vld [vmem:[%s579] sm:$0x3]
      %vm581 = vcmask 1045504
      %v582 = vrot.slane %v353, 2
      %v583 = vrot.slane %v354, 2
      %v584 = vsel %vm581, %v582, %v583
      %v586 = vsel %vm368, %v584, 0
      %v589 = vsel %vm372, %v580, 0
      %591 = vmatprep.subr.bf16.mxu0 0
      %592 = vmatpush1.bf16.msra.mxu0 %v589
      %593 = vmatprep.subr.bf16.mxu0 0
      %594 = vmatpush1.bf16.msra.mxu0 0
      %595 = vmatprep.subr.bf16.mxu0 0
      %596 = vmatpush1.bf16.msra.mxu0 0
      %597 = vmatprep.subr.bf16.mxu0 0
      %598 = vmatpush1.bf16.msra.mxu0 0
      %599 = vmatprep.subr.bf16.mxu0 0
      %600 = vmatpush1.bf16.msra.mxu0 0
      %601 = vmatprep.subr.bf16.mxu0 0
      %602 = vmatpush1.bf16.msra.mxu0 0
      %603 = vmatprep.subr.bf16.mxu0 0
      %604 = vmatpush1.bf16.msra.mxu0 0
      %605 = vmatprep.subr.bf16.mxu0 0
      %606 = vmatpush1.bf16.msra.mxu0 0
      %607 = vmatprep.subr.bf16.mxu0 0
      %608 = vmatpush1.bf16.msra.mxu0 0
      %609 = vmatprep.subr.bf16.mxu0 0
      %610 = vmatpush1.bf16.msra.mxu0 0
      %611 = vmatprep.subr.bf16.mxu0 0
      %612 = vmatpush1.bf16.msra.mxu0 0
      %613 = vmatprep.subr.bf16.mxu0 0
      %614 = vmatpush1.bf16.msra.mxu0 0
      %615 = vmatprep.subr.bf16.mxu0 0
      %616 = vmatpush1.bf16.msra.mxu0 0
      %617 = vmatprep.subr.bf16.mxu0 0
      %618 = vmatpush1.bf16.msra.mxu0 0
      %619 = vmatprep.subr.bf16.mxu0 0
      %620 = vmatpush1.bf16.msra.mxu0 0
      %621 = vmatprep.subr.bf16.mxu0 0
      %622 = vmatpush1.bf16.msra.mxu0 0
      %623 = vmatprep.mubr.bf16.mxu0 0
      %624 = vmatmul.mubr.bf16.gmra.mrb[0].mxu0 %v586
      %v625 = vpop.f32.mrb[0].mxu0
      %v626 = vadd.f32 0.0, %v625
      %v627 = vpop.f32.mrb[0].mxu0
      %v628 = vpop.f32.mrb[0].mxu0
      %v629 = vadd.f32 0.0, %v628
      %v630 = vpop.f32.mrb[0].mxu0
      %631 = vdwg.mxu0
      %v632 = vadd.f32 %v577, %v626
      %v633 = vadd.f32 %v578, %v629
      %v635 = vlaneseq
      %v636 = vshrl.u32 %v635, 7
      %v637 = vsub.s32 0, %v636
      %v638 = vrot.slane %v334, %v637
      %v640 = vmul.f32 %v632, %v638
      %v641 = vmul.f32 %v633, %v638
      %v643 = vlaneseq
      %v644 = vshrl.u32 %v643, 7
      %v645 = vsub.s32 0, %v644
      %v646 = vrot.slane %v335, %v645
      %v648 = vadd.f32 %v640, %v646
      %v649 = vadd.f32 %v641, %v646
      %v650 = vmax.f32 %v648, 0.0
      %v651 = vmax.f32 %v649, 0.0
      %vm654 = vcmask 1040384
      %v655 = vrot.slane %v650, 7
      %v656 = vrot.slane %v651, 7
      %v657 = vsel %vm654, %v655, %v656
      %v660 = vsel %vm654, %v650, %v655
      %vm661 = vcmask 1046528
      %v662 = vrot.slane %v650, 1
      %v663 = vrot.slane %v651, 1
      %v664 = vsel %vm661, %v662, %v663
      %v667 = vsel %vm661, %v663, %v651
      %v668 = vmul.f32 %v650, 0.75
      %v669 = vmul.f32 %v651, 0.75
      %v670 = vmul.f32 %v660, 0.25
      %v671 = vmul.f32 %v657, 0.25
      %v672 = vadd.f32 %v668, %v670
      %v673 = vadd.f32 %v669, %v671
      %v674 = vpack.c.bf16 %v673, %v672
      %v675 = vmul.f32 %v664, 0.25
      %v676 = vmul.f32 %v667, 0.25
      %v677 = vadd.f32 %v668, %v675
      %v678 = vadd.f32 %v669, %v676
      %v679 = vpack.c.bf16 %v678, %v677
      %v681 = vshrl.u32 %v679, 16
      %v683 = vrot.slane %v681, 7
      %v684 = vshll.u32 %v679, 16
      %v686 = vor.u32 %v683, %v684
      %vm688 = vcmask 1040384
      %vm689 = vsmask.f32 256
      %vm690 = vmand %vm688, %vm689
      %v691 = vsel %vm690, 0, %v686
      %v693 = vshrl.u32 %v674, 16
      %v695 = vshll.u32 %v674, 16
      %v697 = vrot.slane %v695, 1
      %v698 = vor.u32 %v693, %v697
      %vm700 = vcmask 1047552
      %vm701 = vmand %vm700, %vm355
      %v702 = vsel %vm701, %v698, 0
      %v703 = vld [vmem:[%s4] sm:$0xf]
      %v704 = vld [vmem:[%s4 + $0x4] sm:$0xf]
      %v705 = vld [vmem:[%s4 + $0x8] sm:$0xf]
      %v706 = vld [vmem:[%s4 + $0xc] sm:$0xf]
      %s707 = scalar_lea.vmem %s4, 16
      %v708 = vld [vmem:[%s707] sm:$0xf]
      %v709 = vld [vmem:[%s707 + $0x4] sm:$0xf]
      %v710 = vld [vmem:[%s707 + $0x8] sm:$0xf]
      %v711 = vld [vmem:[%s707 + $0xc] sm:$0xf]
      %v716 = vunpack.c.l.b16 %v708
      %v717 = vunpack.c.l.b16 %v709
      %v718 = vunpack.c.l.b16 %v710
      %v719 = vunpack.c.l.b16 %v711
      %v720 = vpack.c.b16 %v717, %v716
      %v721 = vpack.c.b16 %v719, %v718
      %vm724 = vcmask 261120
      %v725 = vsel %vm724, %v674, 0
      %727 = vmatprep.subr.bf16.mxu0 0
      %728 = vmatpush1.bf16.msra.mxu0 %v720
      %729 = vmatprep.subr.bf16.mxu0 0
      %730 = vmatpush1.bf16.msra.mxu0 %v721
      %731 = vmatprep.subr.bf16.mxu0 0
      %732 = vmatpush1.bf16.msra.mxu0 0
      %733 = vmatprep.subr.bf16.mxu0 0
      %734 = vmatpush1.bf16.msra.mxu0 0
      %735 = vmatprep.subr.bf16.mxu0 0
      %736 = vmatpush1.bf16.msra.mxu0 0
      %737 = vmatprep.subr.bf16.mxu0 0
      %738 = vmatpush1.bf16.msra.mxu0 0
      %739 = vmatprep.subr.bf16.mxu0 0
      %740 = vmatpush1.bf16.msra.mxu0 0
      %741 = vmatprep.subr.bf16.mxu0 0
      %742 = vmatpush1.bf16.msra.mxu0 0
      %743 = vmatprep.subr.bf16.mxu0 0
      %744 = vmatpush1.bf16.msra.mxu0 0
      %745 = vmatprep.subr.bf16.mxu0 0
      %746 = vmatpush1.bf16.msra.mxu0 0
      %747 = vmatprep.subr.bf16.mxu0 0
      %748 = vmatpush1.bf16.msra.mxu0 0
      %749 = vmatprep.subr.bf16.mxu0 0
      %750 = vmatpush1.bf16.msra.mxu0 0
      %751 = vmatprep.subr.bf16.mxu0 0
      %752 = vmatpush1.bf16.msra.mxu0 0
      %753 = vmatprep.subr.bf16.mxu0 0
      %754 = vmatpush1.bf16.msra.mxu0 0
      %755 = vmatprep.subr.bf16.mxu0 0
      %756 = vmatpush1.bf16.msra.mxu0 0
      %757 = vmatprep.subr.bf16.mxu0 0
      %758 = vmatpush1.bf16.msra.mxu0 0
      %759 = vmatprep.mubr.bf16.mxu0 0
      %760 = vmatmul.mubr.bf16.gmra.mrb[0].mxu0 %v725
      %v761 = vpop.f32.mrb[0].mxu0
      %v762 = vadd.f32 0.0, %v761
      %v763 = vpop.f32.mrb[0].mxu0
      %v764 = vpop.f32.mrb[0].mxu0
      %v765 = vadd.f32 0.0, %v764
      %v766 = vpop.f32.mrb[0].mxu0
      %767 = vdwg.mxu0
      %v772 = vunpack.c.l.b16 %v703
      %v773 = vunpack.c.l.b16 %v704
      %v774 = vunpack.c.l.b16 %v705
      %v775 = vunpack.c.l.b16 %v706
      %v776 = vpack.c.b16 %v773, %v772
      %v777 = vpack.c.b16 %v775, %v774
      %v781 = vsel %vm724, %v691, 0
      %783 = vmatprep.subr.bf16.mxu0 0
      %784 = vmatpush1.bf16.msra.mxu0 %v776
      %785 = vmatprep.subr.bf16.mxu0 0
      %786 = vmatpush1.bf16.msra.mxu0 %v777
      %787 = vmatprep.subr.bf16.mxu0 0
      %788 = vmatpush1.bf16.msra.mxu0 0
      %789 = vmatprep.subr.bf16.mxu0 0
      %790 = vmatpush1.bf16.msra.mxu0 0
      %791 = vmatprep.subr.bf16.mxu0 0
      %792 = vmatpush1.bf16.msra.mxu0 0
      %793 = vmatprep.subr.bf16.mxu0 0
      %794 = vmatpush1.bf16.msra.mxu0 0
      %795 = vmatprep.subr.bf16.mxu0 0
      %796 = vmatpush1.bf16.msra.mxu0 0
      %797 = vmatprep.subr.bf16.mxu0 0
      %798 = vmatpush1.bf16.msra.mxu0 0
      %799 = vmatprep.subr.bf16.mxu0 0
      %800 = vmatpush1.bf16.msra.mxu0 0
      %801 = vmatprep.subr.bf16.mxu0 0
      %802 = vmatpush1.bf16.msra.mxu0 0
      %803 = vmatprep.subr.bf16.mxu0 0
      %804 = vmatpush1.bf16.msra.mxu0 0
      %805 = vmatprep.subr.bf16.mxu0 0
      %806 = vmatpush1.bf16.msra.mxu0 0
      %807 = vmatprep.subr.bf16.mxu0 0
      %808 = vmatpush1.bf16.msra.mxu0 0
      %809 = vmatprep.subr.bf16.mxu0 0
      %810 = vmatpush1.bf16.msra.mxu0 0
      %811 = vmatprep.subr.bf16.mxu0 0
      %812 = vmatpush1.bf16.msra.mxu0 0
      %813 = vmatprep.subr.bf16.mxu0 0
      %814 = vmatpush1.bf16.msra.mxu0 0
      %815 = vmatprep.mubr.bf16.mxu0 0
      %816 = vmatmul.mubr.bf16.gmra.mrb[0].mxu0 %v781
      %v817 = vpop.f32.mrb[0].mxu0
      %v818 = vadd.f32 %v762, %v817
      %v819 = vpop.f32.mrb[0].mxu0
      %v820 = vpop.f32.mrb[0].mxu0
      %v821 = vadd.f32 %v765, %v820
      %v822 = vpop.f32.mrb[0].mxu0
      %823 = vdwg.mxu0
      %s824 = scalar_lea.vmem %s4, 32
      %v825 = vld [vmem:[%s824] sm:$0xf]
      %v826 = vld [vmem:[%s824 + $0x4] sm:$0xf]
      %v827 = vld [vmem:[%s824 + $0x8] sm:$0xf]
      %v828 = vld [vmem:[%s824 + $0xc] sm:$0xf]
      %v833 = vunpack.c.l.b16 %v825
      %v834 = vunpack.c.l.b16 %v826
      %v835 = vunpack.c.l.b16 %v827
      %v836 = vunpack.c.l.b16 %v828
      %v837 = vpack.c.b16 %v834, %v833
      %v838 = vpack.c.b16 %v836, %v835
      %v841 = vsel %vm724, %v679, 0
      %843 = vmatprep.subr.bf16.mxu0 0
      %844 = vmatpush1.bf16.msra.mxu0 %v837
      %845 = vmatprep.subr.bf16.mxu0 0
      %846 = vmatpush1.bf16.msra.mxu0 %v838
      %847 = vmatprep.subr.bf16.mxu0 0
      %848 = vmatpush1.bf16.msra.mxu0 0
      %849 = vmatprep.subr.bf16.mxu0 0
      %850 = vmatpush1.bf16.msra.mxu0 0
      %851 = vmatprep.subr.bf16.mxu0 0
      %852 = vmatpush1.bf16.msra.mxu0 0
      %853 = vmatprep.subr.bf16.mxu0 0
      %854 = vmatpush1.bf16.msra.mxu0 0
      %855 = vmatprep.subr.bf16.mxu0 0
      %856 = vmatpush1.bf16.msra.mxu0 0
      %857 = vmatprep.subr.bf16.mxu0 0
      %858 = vmatpush1.bf16.msra.mxu0 0
      %859 = vmatprep.subr.bf16.mxu0 0
      %860 = vmatpush1.bf16.msra.mxu0 0
      %861 = vmatprep.subr.bf16.mxu0 0
      %862 = vmatpush1.bf16.msra.mxu0 0
      %863 = vmatprep.subr.bf16.mxu0 0
      %864 = vmatpush1.bf16.msra.mxu0 0
      %865 = vmatprep.subr.bf16.mxu0 0
      %866 = vmatpush1.bf16.msra.mxu0 0
      %867 = vmatprep.subr.bf16.mxu0 0
      %868 = vmatpush1.bf16.msra.mxu0 0
      %869 = vmatprep.subr.bf16.mxu0 0
      %870 = vmatpush1.bf16.msra.mxu0 0
      %871 = vmatprep.subr.bf16.mxu0 0
      %872 = vmatpush1.bf16.msra.mxu0 0
      %873 = vmatprep.subr.bf16.mxu0 0
      %874 = vmatpush1.bf16.msra.mxu0 0
      %875 = vmatprep.mubr.bf16.mxu0 0
      %876 = vmatmul.mubr.bf16.gmra.mrb[0].mxu0 %v841
      %v877 = vpop.f32.mrb[0].mxu0
      %v878 = vadd.f32 0.0, %v877
      %v879 = vpop.f32.mrb[0].mxu0
      %v880 = vpop.f32.mrb[0].mxu0
      %v881 = vadd.f32 0.0, %v880
      %v882 = vpop.f32.mrb[0].mxu0
      %883 = vdwg.mxu0
      %v884 = vadd.f32 %v818, %v878
      %v885 = vadd.f32 %v821, %v881
      %886 = vmatprep.subr.bf16.mxu0 0
      %887 = vmatpush1.bf16.msra.mxu0 %v720
      %888 = vmatprep.subr.bf16.mxu0 0
      %889 = vmatpush1.bf16.msra.mxu0 %v721
      %890 = vmatprep.subr.bf16.mxu0 0
      %891 = vmatpush1.bf16.msra.mxu0 0
      %892 = vmatprep.subr.bf16.mxu0 0
      %893 = vmatpush1.bf16.msra.mxu0 0
      %894 = vmatprep.subr.bf16.mxu0 0
      %895 = vmatpush1.bf16.msra.mxu0 0
      %896 = vmatprep.subr.bf16.mxu0 0
      %897 = vmatpush1.bf16.msra.mxu0 0
      %898 = vmatprep.subr.bf16.mxu0 0
      %899 = vmatpush1.bf16.msra.mxu0 0
      %900 = vmatprep.subr.bf16.mxu0 0
      %901 = vmatpush1.bf16.msra.mxu0 0
      %902 = vmatprep.subr.bf16.mxu0 0
      %903 = vmatpush1.bf16.msra.mxu0 0
      %904 = vmatprep.subr.bf16.mxu0 0
      %905 = vmatpush1.bf16.msra.mxu0 0
      %906 = vmatprep.subr.bf16.mxu0 0
      %907 = vmatpush1.bf16.msra.mxu0 0
      %908 = vmatprep.subr.bf16.mxu0 0
      %909 = vmatpush1.bf16.msra.mxu0 0
      %910 = vmatprep.subr.bf16.mxu0 0
      %911 = vmatpush1.bf16.msra.mxu0 0
      %912 = vmatprep.subr.bf16.mxu0 0
      %913 = vmatpush1.bf16.msra.mxu0 0
      %914 = vmatprep.subr.bf16.mxu0 0
      %915 = vmatpush1.bf16.msra.mxu0 0
      %916 = vmatprep.subr.bf16.mxu0 0
      %917 = vmatpush1.bf16.msra.mxu0 0
      %918 = vmatprep.mubr.bf16.mxu0 0
      %919 = vmatmul.mubr.bf16.gmra.mrb[0].mxu0 %v841
      %v920 = vpop.f32.mrb[0].mxu0
      %v921 = vadd.f32 0.0, %v920
      %v922 = vpop.f32.mrb[0].mxu0
      %v923 = vpop.f32.mrb[0].mxu0
      %v924 = vadd.f32 0.0, %v923
      %v925 = vpop.f32.mrb[0].mxu0
      %926 = vdwg.mxu0
      %927 = vmatprep.subr.bf16.mxu0 0
      %928 = vmatpush1.bf16.msra.mxu0 %v776
      %929 = vmatprep.subr.bf16.mxu0 0
      %930 = vmatpush1.bf16.msra.mxu0 %v777
      %931 = vmatprep.subr.bf16.mxu0 0
      %932 = vmatpush1.bf16.msra.mxu0 0
      %933 = vmatprep.subr.bf16.mxu0 0
      %934 = vmatpush1.bf16.msra.mxu0 0
      %935 = vmatprep.subr.bf16.mxu0 0
      %936 = vmatpush1.bf16.msra.mxu0 0
      %937 = vmatprep.subr.bf16.mxu0 0
      %938 = vmatpush1.bf16.msra.mxu0 0
      %939 = vmatprep.subr.bf16.mxu0 0
      %940 = vmatpush1.bf16.msra.mxu0 0
      %941 = vmatprep.subr.bf16.mxu0 0
      %942 = vmatpush1.bf16.msra.mxu0 0
      %943 = vmatprep.subr.bf16.mxu0 0
      %944 = vmatpush1.bf16.msra.mxu0 0
      %945 = vmatprep.subr.bf16.mxu0 0
      %946 = vmatpush1.bf16.msra.mxu0 0
      %947 = vmatprep.subr.bf16.mxu0 0
      %948 = vmatpush1.bf16.msra.mxu0 0
      %949 = vmatprep.subr.bf16.mxu0 0
      %950 = vmatpush1.bf16.msra.mxu0 0
      %951 = vmatprep.subr.bf16.mxu0 0
      %952 = vmatpush1.bf16.msra.mxu0 0
      %953 = vmatprep.subr.bf16.mxu0 0
      %954 = vmatpush1.bf16.msra.mxu0 0
      %955 = vmatprep.subr.bf16.mxu0 0
      %956 = vmatpush1.bf16.msra.mxu0 0
      %957 = vmatprep.subr.bf16.mxu0 0
      %958 = vmatpush1.bf16.msra.mxu0 0
      %959 = vmatprep.mubr.bf16.mxu0 0
      %960 = vmatmul.mubr.bf16.gmra.mrb[0].mxu0 %v725
      %v961 = vpop.f32.mrb[0].mxu0
      %v962 = vadd.f32 %v921, %v961
      %v963 = vpop.f32.mrb[0].mxu0
      %v964 = vpop.f32.mrb[0].mxu0
      %v965 = vadd.f32 %v924, %v964
      %v966 = vpop.f32.mrb[0].mxu0
      %967 = vdwg.mxu0
      %v969 = vsel %vm724, %v702, 0
      %971 = vmatprep.subr.bf16.mxu0 0
      %972 = vmatpush1.bf16.msra.mxu0 %v837
      %973 = vmatprep.subr.bf16.mxu0 0
      %974 = vmatpush1.bf16.msra.mxu0 %v838
      %975 = vmatprep.subr.bf16.mxu0 0
      %976 = vmatpush1.bf16.msra.mxu0 0
      %977 = vmatprep.subr.bf16.mxu0 0
      %978 = vmatpush1.bf16.msra.mxu0 0
      %979 = vmatprep.subr.bf16.mxu0 0
      %980 = vmatpush1.bf16.msra.mxu0 0
      %981 = vmatprep.subr.bf16.mxu0 0
      %982 = vmatpush1.bf16.msra.mxu0 0
      %983 = vmatprep.subr.bf16.mxu0 0
      %984 = vmatpush1.bf16.msra.mxu0 0
      %985 = vmatprep.subr.bf16.mxu0 0
      %986 = vmatpush1.bf16.msra.mxu0 0
      %987 = vmatprep.subr.bf16.mxu0 0
      %988 = vmatpush1.bf16.msra.mxu0 0
      %989 = vmatprep.subr.bf16.mxu0 0
      %990 = vmatpush1.bf16.msra.mxu0 0
      %991 = vmatprep.subr.bf16.mxu0 0
      %992 = vmatpush1.bf16.msra.mxu0 0
      %993 = vmatprep.subr.bf16.mxu0 0
      %994 = vmatpush1.bf16.msra.mxu0 0
      %995 = vmatprep.subr.bf16.mxu0 0
      %996 = vmatpush1.bf16.msra.mxu0 0
      %997 = vmatprep.subr.bf16.mxu0 0
      %998 = vmatpush1.bf16.msra.mxu0 0
      %999 = vmatprep.subr.bf16.mxu0 0
      %1000 = vmatpush1.bf16.msra.mxu0 0
      %1001 = vmatprep.subr.bf16.mxu0 0
      %1002 = vmatpush1.bf16.msra.mxu0 0
      %1003 = vmatprep.mubr.bf16.mxu0 0
      %1004 = vmatmul.mubr.bf16.gmra.mrb[0].mxu0 %v969
      %v1005 = vpop.f32.mrb[0].mxu0
      %v1006 = vadd.f32 0.0, %v1005
      %v1007 = vpop.f32.mrb[0].mxu0
      %v1008 = vpop.f32.mrb[0].mxu0
      %v1009 = vadd.f32 0.0, %v1008
      %v1010 = vpop.f32.mrb[0].mxu0
      %1011 = vdwg.mxu0
      %v1012 = vadd.f32 %v962, %v1006
      %v1013 = vadd.f32 %v965, %v1009
      %v1015 = vlaneseq
      %v1016 = vshrl.u32 %v1015, 7
      %v1017 = vsub.s32 0, %v1016
      %v1018 = vrot.slane %v336, %v1017
      %v1020 = vmul.f32 %v884, %v1018
      %v1021 = vmul.f32 %v885, %v1018
      %v1023 = vlaneseq
      %v1024 = vshrl.u32 %v1023, 7
      %v1025 = vsub.s32 0, %v1024
      %v1026 = vrot.slane %v337, %v1025
      %v1028 = vadd.f32 %v1020, %v1026
      %v1029 = vadd.f32 %v1021, %v1026
      %v1030 = vmax.f32 %v1028, 0.0
      %v1031 = vmax.f32 %v1029, 0.0
      %v1032 = vpack.c.bf16 %v1031, %v1030
      %v1033 = vmul.f32 %v1012, %v1018
      %v1034 = vmul.f32 %v1013, %v1018
      %v1035 = vadd.f32 %v1033, %v1026
      %v1036 = vadd.f32 %v1034, %v1026
      %v1037 = vmax.f32 %v1035, 0.0
      %v1038 = vmax.f32 %v1036, 0.0
      %v1039 = vpack.c.bf16 %v1038, %v1037
      %v1041 = vlaneseq
      %v1042 = vshrl.u32 %v1041, 7
      %v1043 = vsub.s32 0, %v1042
      %v1044 = vrot.slane %v340, %v1043
      %v1048 = vunpack.c.l.b16 %v338
      %v1049 = vunpack.c.l.b16 %v339
      %v1050 = vpack.c.b16 %v1049, %v1048
      %vm1052 = vcmask 130048
      %v1054 = vsel %vm1052, %v1032, 0
      %1056 = vmatprep.subr.bf16.mxu0 0
      %1057 = vmatpush1.bf16.msra.mxu0 %v1050
      %1058 = vmatprep.subr.bf16.mxu0 0
      %1059 = vmatpush1.bf16.msra.mxu0 0
      %1060 = vmatprep.subr.bf16.mxu0 0
      %1061 = vmatpush1.bf16.msra.mxu0 0
      %1062 = vmatprep.subr.bf16.mxu0 0
      %1063 = vmatpush1.bf16.msra.mxu0 0
      %1064 = vmatprep.subr.bf16.mxu0 0
      %1065 = vmatpush1.bf16.msra.mxu0 0
      %1066 = vmatprep.subr.bf16.mxu0 0
      %1067 = vmatpush1.bf16.msra.mxu0 0
      %1068 = vmatprep.subr.bf16.mxu0 0
      %1069 = vmatpush1.bf16.msra.mxu0 0
      %1070 = vmatprep.subr.bf16.mxu0 0
      %1071 = vmatpush1.bf16.msra.mxu0 0
      %1072 = vmatprep.subr.bf16.mxu0 0
      %1073 = vmatpush1.bf16.msra.mxu0 0
      %1074 = vmatprep.subr.bf16.mxu0 0
      %1075 = vmatpush1.bf16.msra.mxu0 0
      %1076 = vmatprep.subr.bf16.mxu0 0
      %1077 = vmatpush1.bf16.msra.mxu0 0
      %1078 = vmatprep.subr.bf16.mxu0 0
      %1079 = vmatpush1.bf16.msra.mxu0 0
      %1080 = vmatprep.subr.bf16.mxu0 0
      %1081 = vmatpush1.bf16.msra.mxu0 0
      %1082 = vmatprep.subr.bf16.mxu0 0
      %1083 = vmatpush1.bf16.msra.mxu0 0
      %1084 = vmatprep.subr.bf16.mxu0 0
      %1085 = vmatpush1.bf16.msra.mxu0 0
      %1086 = vmatprep.subr.bf16.mxu0 0
      %1087 = vmatpush1.bf16.msra.mxu0 0
      %1088 = vmatprep.mubr.bf16.mxu0 0
      %1089 = vmatmul.mubr.bf16.gmra.mrb[0].mxu0 %v1054
      %v1090 = vpop.f32.mrb[0].mxu0
      %v1091 = vadd.f32 %v1044, %v1090
      %v1092 = vpop.f32.mrb[0].mxu0
      %v1093 = vpop.f32.mrb[0].mxu0
      %v1094 = vadd.f32 %v1044, %v1093
      %v1095 = vpop.f32.mrb[0].mxu0
      %1096 = vdwg.mxu0
      %v1098 = vsel %vm1052, %v1039, 0
      %1100 = vmatprep.subr.bf16.mxu0 0
      %1101 = vmatpush1.bf16.msra.mxu0 %v1050
      %1102 = vmatprep.subr.bf16.mxu0 0
      %1103 = vmatpush1.bf16.msra.mxu0 0
      %1104 = vmatprep.subr.bf16.mxu0 0
      %1105 = vmatpush1.bf16.msra.mxu0 0
      %1106 = vmatprep.subr.bf16.mxu0 0
      %1107 = vmatpush1.bf16.msra.mxu0 0
      %1108 = vmatprep.subr.bf16.mxu0 0
      %1109 = vmatpush1.bf16.msra.mxu0 0
      %1110 = vmatprep.subr.bf16.mxu0 0
      %1111 = vmatpush1.bf16.msra.mxu0 0
      %1112 = vmatprep.subr.bf16.mxu0 0
      %1113 = vmatpush1.bf16.msra.mxu0 0
      %1114 = vmatprep.subr.bf16.mxu0 0
      %1115 = vmatpush1.bf16.msra.mxu0 0
      %1116 = vmatprep.subr.bf16.mxu0 0
      %1117 = vmatpush1.bf16.msra.mxu0 0
      %1118 = vmatprep.subr.bf16.mxu0 0
      %1119 = vmatpush1.bf16.msra.mxu0 0
      %1120 = vmatprep.subr.bf16.mxu0 0
      %1121 = vmatpush1.bf16.msra.mxu0 0
      %1122 = vmatprep.subr.bf16.mxu0 0
      %1123 = vmatpush1.bf16.msra.mxu0 0
      %1124 = vmatprep.subr.bf16.mxu0 0
      %1125 = vmatpush1.bf16.msra.mxu0 0
      %1126 = vmatprep.subr.bf16.mxu0 0
      %1127 = vmatpush1.bf16.msra.mxu0 0
      %1128 = vmatprep.subr.bf16.mxu0 0
      %1129 = vmatpush1.bf16.msra.mxu0 0
      %1130 = vmatprep.subr.bf16.mxu0 0
      %1131 = vmatpush1.bf16.msra.mxu0 0
      %1132 = vmatprep.mubr.bf16.mxu0 0
      %1133 = vmatmul.mubr.bf16.gmra.mrb[0].mxu0 %v1098
      %v1134 = vpop.f32.mrb[0].mxu0
      %v1135 = vadd.f32 %v1044, %v1134
      %v1136 = vpop.f32.mrb[0].mxu0
      %v1137 = vpop.f32.mrb[0].mxu0
      %v1138 = vadd.f32 %v1044, %v1137
      %v1139 = vpop.f32.mrb[0].mxu0
      %1140 = vdwg.mxu0
      %1141 = vxpose.xlu0.b32.start [1/16] %v1091, 128
      %1142 = vxpose.xlu0.b32.cont [2/16] %v1094, 128
      %1143 = vxpose.xlu0.b32.cont [3/16] 0.0, 128
      %1144 = vxpose.xlu0.b32.cont [4/16] 0.0, 128
      %1145 = vxpose.xlu0.b32.cont [5/16] 0.0, 128
      %1146 = vxpose.xlu0.b32.cont [6/16] 0.0, 128
      %1147 = vxpose.xlu0.b32.cont [7/16] 0.0, 128
      %1148 = vxpose.xlu0.b32.cont [8/16] 0.0, 128
      %1149 = vxpose.xlu0.b32.cont [9/16] 0.0, 128
      %1150 = vxpose.xlu0.b32.cont [10/16] 0.0, 128
      %1151 = vxpose.xlu0.b32.cont [11/16] 0.0, 128
      %1152 = vxpose.xlu0.b32.cont [12/16] 0.0, 128
      %1153 = vxpose.xlu0.b32.cont [13/16] 0.0, 128
      %1154 = vxpose.xlu0.b32.cont [14/16] 0.0, 128
      %1155 = vxpose.xlu0.b32.cont [15/16] 0.0, 128
      %1156 = vxpose.xlu0.b32.end [16/16] 0.0, 128
      %v1157 = vpop.trf.xlu0
      %v1158 = vpop.trf.xlu0
      %v1159 = vpop.trf.xlu0
      %v1160 = vpop.trf.xlu0
      %v1161 = vpop.trf.xlu0
      %v1162 = vpop.trf.xlu0
      %v1163 = vpop.trf.xlu0
      %v1164 = vpop.trf.xlu0
      %v1165 = vpop.trf.xlu0
      %v1166 = vpop.trf.xlu0
      %v1167 = vpop.trf.xlu0
      %v1168 = vpop.trf.xlu0
      %v1169 = vpop.trf.xlu0
      %v1170 = vpop.trf.xlu0
      %v1171 = vpop.trf.xlu0
      %v1172 = vpop.trf.xlu0
      %1173 = vxpose.xlu0.b32.start [1/16] %v1135, 128
      %1174 = vxpose.xlu0.b32.cont [2/16] %v1138, 128
      %1175 = vxpose.xlu0.b32.cont [3/16] 0.0, 128
      %1176 = vxpose.xlu0.b32.cont [4/16] 0.0, 128
      %1177 = vxpose.xlu0.b32.cont [5/16] 0.0, 128
      %1178 = vxpose.xlu0.b32.cont [6/16] 0.0, 128
      %1179 = vxpose.xlu0.b32.cont [7/16] 0.0, 128
      %1180 = vxpose.xlu0.b32.cont [8/16] 0.0, 128
      %1181 = vxpose.xlu0.b32.cont [9/16] 0.0, 128
      %1182 = vxpose.xlu0.b32.cont [10/16] 0.0, 128
      %1183 = vxpose.xlu0.b32.cont [11/16] 0.0, 128
      %1184 = vxpose.xlu0.b32.cont [12/16] 0.0, 128
      %1185 = vxpose.xlu0.b32.cont [13/16] 0.0, 128
      %1186 = vxpose.xlu0.b32.cont [14/16] 0.0, 128
      %1187 = vxpose.xlu0.b32.cont [15/16] 0.0, 128
      %1188 = vxpose.xlu0.b32.end [16/16] 0.0, 128
      %v1189 = vpop.trf.xlu0
      %v1190 = vpop.trf.xlu0
      %v1191 = vpop.trf.xlu0
      %v1192 = vpop.trf.xlu0
      %v1193 = vpop.trf.xlu0
      %v1194 = vpop.trf.xlu0
      %v1195 = vpop.trf.xlu0
      %v1196 = vpop.trf.xlu0
      %v1197 = vpop.trf.xlu0
      %v1198 = vpop.trf.xlu0
      %v1199 = vpop.trf.xlu0
      %v1200 = vpop.trf.xlu0
      %v1201 = vpop.trf.xlu0
      %v1202 = vpop.trf.xlu0
      %v1203 = vpop.trf.xlu0
      %v1204 = vpop.trf.xlu0
      %1206 = vrot.lane.b32.xlu0 %v1189, 1
      %v1207 = vpop.permute.xlu0 %1206
      %vm1209 = vcmask 7168
      %v1210 = vsel %vm1209, %v1157, %v1207
      %1212 = vrot.lane.b32.xlu0 %v1157, 127
      %v1213 = vpop.permute.xlu0 %1212
      %vm1215 = vcmask 121856
      %v1216 = vsel %vm1215, %v1213, %v1189
      %v1217 = vmul.f32 %v1157, 0.75
      %v1218 = vmul.f32 %v1210, 0.25
      %v1219 = vadd.f32 %v1217, %v1218
      %v1222 = vunpack.c.l.s4 1966171168
      %v1223 = vunpack.c.0.s8 %v1222
      %v1224 = vlaneseq
      %v1225 = vshrl.u32 %v1224, 7
      %v1226 = vsub.s32 %v1223, %v1225
      %v1227 = vrot.slane %v1219, %v1226
      %v1228 = vcombine.high %v1227, %v1227
      %v1230 = vunpack.c.l.s4 1966171168
      %v1231 = vunpack.c.0.s8 %v1230
      %v1232 = vlaneseq
      %v1233 = vshrl.u32 %v1232, 7
      %v1234 = vsub.s32 %v1231, %v1233
      %v1235 = vrot.slane %v1227, %v1234
      %v1237 = vunpack.c.l.s4 1966171168
      %v1238 = vunpack.c.0.s8 %v1237
      %v1239 = vlaneseq
      %v1240 = vshrl.u32 %v1239, 7
      %v1241 = vsub.s32 %v1238, %v1240
      %v1242 = vrot.slane %v1228, %v1241
      %v1243 = vcombine.high %v1235, %v1235
      %vm1247 = vcmask 122880
      %1248 = vst.msk [vmem:[%s332] sm:$0x1] %vm1247, %v1235
      %1249 = vst.msk [vmem:[%s332 + $0x4] sm:$0x1] %vm1247, %v1242
      %1250 = vst.msk [vmem:[%s332 + $0x8] sm:$0x1] %vm1247, %v1243
      %v1251 = vmul.f32 %v1189, 0.25
      %v1252 = vadd.f32 %v1217, %v1251
      %v1255 = vunpack.c.l.s4 1966171168
      %v1256 = vunpack.c.0.s8 %v1255
      %v1257 = vlaneseq
      %v1258 = vshrl.u32 %v1257, 7
      %v1259 = vsub.s32 %v1256, %v1258
      %v1260 = vrot.slane %v1252, %v1259
      %v1261 = vcombine.high %v1260, %v1260
      %v1263 = vunpack.c.l.s4 1966171168
      %v1264 = vunpack.c.0.s8 %v1263
      %v1265 = vlaneseq
      %v1266 = vshrl.u32 %v1265, 7
      %v1267 = vsub.s32 %v1264, %v1266
      %v1268 = vrot.slane %v1260, %v1267
      %v1270 = vunpack.c.l.s4 1966171168
      %v1271 = vunpack.c.0.s8 %v1270
      %v1272 = vlaneseq
      %v1273 = vshrl.u32 %v1272, 7
      %v1274 = vsub.s32 %v1271, %v1273
      %v1275 = vrot.slane %v1261, %v1274
      %v1276 = vcombine.high %v1268, %v1268
      %1280 = vst.msk [vmem:[%s332 + $0x1] sm:$0x1] %vm1247, %v1268
      %1281 = vst.msk [vmem:[%s332 + $0x5] sm:$0x1] %vm1247, %v1275
      %1282 = vst.msk [vmem:[%s332 + $0x9] sm:$0x1] %vm1247, %v1276
      %v1283 = vmul.f32 %v1157, 0.25
      %v1284 = vmul.f32 %v1189, 0.75
      %v1285 = vadd.f32 %v1283, %v1284
      %v1288 = vunpack.c.l.s4 1966171168
      %v1289 = vunpack.c.0.s8 %v1288
      %v1290 = vlaneseq
      %v1291 = vshrl.u32 %v1290, 7
      %v1292 = vsub.s32 %v1289, %v1291
      %v1293 = vrot.slane %v1285, %v1292
      %v1294 = vcombine.high %v1293, %v1293
      %v1296 = vunpack.c.l.s4 1966171168
      %v1297 = vunpack.c.0.s8 %v1296
      %v1298 = vlaneseq
      %v1299 = vshrl.u32 %v1298, 7
      %v1300 = vsub.s32 %v1297, %v1299
      %v1301 = vrot.slane %v1293, %v1300
      %v1303 = vunpack.c.l.s4 1966171168
      %v1304 = vunpack.c.0.s8 %v1303
      %v1305 = vlaneseq
      %v1306 = vshrl.u32 %v1305, 7
      %v1307 = vsub.s32 %v1304, %v1306
      %v1308 = vrot.slane %v1294, %v1307
      %v1309 = vcombine.high %v1301, %v1301
      %1313 = vst.msk [vmem:[%s332 + $0x2] sm:$0x1] %vm1247, %v1301
      %1314 = vst.msk [vmem:[%s332 + $0x6] sm:$0x1] %vm1247, %v1308
      %1315 = vst.msk [vmem:[%s332 + $0xa] sm:$0x1] %vm1247, %v1309
      %v1316 = vmul.f32 %v1216, 0.25
      %v1317 = vadd.f32 %v1284, %v1316
      %v1320 = vunpack.c.l.s4 1966171168
      %v1321 = vunpack.c.0.s8 %v1320
      %v1322 = vlaneseq
      %v1323 = vshrl.u32 %v1322, 7
      %v1324 = vsub.s32 %v1321, %v1323
      %v1325 = vrot.slane %v1317, %v1324
      %v1326 = vcombine.high %v1325, %v1325
      %v1328 = vunpack.c.l.s4 1966171168
      %v1329 = vunpack.c.0.s8 %v1328
      %v1330 = vlaneseq
      %v1331 = vshrl.u32 %v1330, 7
      %v1332 = vsub.s32 %v1329, %v1331
      %v1333 = vrot.slane %v1325, %v1332
      %v1335 = vunpack.c.l.s4 1966171168
      %v1336 = vunpack.c.0.s8 %v1335
      %v1337 = vlaneseq
      %v1338 = vshrl.u32 %v1337, 7
      %v1339 = vsub.s32 %v1336, %v1338
      %v1340 = vrot.slane %v1326, %v1339
      %v1341 = vcombine.high %v1333, %v1333
      %1345 = vst.msk [vmem:[%s332 + $0x3] sm:$0x1] %vm1247, %v1333
      %1346 = vst.msk [vmem:[%s332 + $0x7] sm:$0x1] %vm1247, %v1340
      %1347 = vst.msk [vmem:[%s332 + $0xb] sm:$0x1] %vm1247, %v1341
      %p1348 = scmp.lt.s32.totalorder %s20, 1
      %s1349 = scalar_select %p1348, %s20, 1
      %s1350 = smul.addr %s1349, 3
      %s1351 = smul.addr %s1350, 4
      %s1352 = scalar_lea.vmem %s9, %s1351
      // Predicated region
      $region57: #{cnn_ts_dec_forward.1} parent=55 // pred_check
        %p1353 = pneg %p232
      $region58: #{cnn_ts_dec_forward.1} parent=55 // pred_check_branch
        %1355 = sbr.rel (%p1353) target = $region60
      $region59: #{cnn_ts_dec_forward.1} parent=55 // pred_region
        _
      $region60: #{cnn_ts_dec_forward.1} parent=55 // pred_fallthru
        _
    $region56: #{cnn_ts_dec_forward.1} parent=5 // pred_fallthru
      _
    %p1356 = scmp.le.s32.totalorder 2, %s15
    // Predicated region
    $region61: #{cnn_ts_dec_forward.1} parent=5 // pred_check
      %p1357 = pneg %p1356
    $region62: #{cnn_ts_dec_forward.1} parent=5 // pred_check_branch
      %1359 = sbr.rel (%p1357) target = $region64
    $region63: #{cnn_ts_dec_forward.1} parent=5 // pred_region
      %s1360 = ssub.s32 %s15, 2
      // Predicated region
      $region65: #{cnn_ts_dec_forward.1} parent=63 // pred_check
        %p1361 = pneg %p238
      $region66: #{cnn_ts_dec_forward.1} parent=63 // pred_check_branch
        %1363 = sbr.rel (%p1361) target = $region68
      $region67: #{cnn_ts_dec_forward.1} parent=63 // pred_region
        %p1364 = scmp.lt.s32.totalorder %s21, 1
        %s1365 = scalar_select %p1364, %s21, 1
        %s1366 = smul.addr %s1365, 3
        %s1367 = smul.addr %s1366, 4
        %s1368 = scalar_lea.vmem %s9, %s1367
      $region68: #{cnn_ts_dec_forward.1} parent=63 // pred_fallthru
        _
    $region64: #{cnn_ts_dec_forward.1} parent=5 // pred_fallthru
      _
  $region6: #{cnn_ts_dec_forward.1} parent=0 // loop_footer
    %s19 = sadd.s32 1, %s15
  $region7: #{cnn_ts_dec_forward.1} parent=0 // loop_footer_branch
    %14 = sbr.rel target = $region3
  $region8: #{cnn_ts_dec_forward.1} parent=0 // loop_exit
    _

</llo_original>
